<compile_context>
chip_gen: v6e
topology: v6e:2x2x1
jax: 0.10.0
libtpu: 0.0.40
codegen_flags: <defaults>
</compile_context>

<pallas_src>
import functools

import jax
import jax.numpy as jnp
from jax.experimental import pallas as pl
from jax.experimental.pallas import tpu as pltpu

_LANES = 128      # TPU lane width; every packed parameter block is padded to 128 lanes.
_SUBLANES = 8     # sublane granularity; every packed block starts at a multiple of 8 rows.


def _round_up(n, m):
    return ((n + m - 1) // m) * m


# ------------------------- parameter packing (once, at init) -------------------------
def _pack_params(params):
    """Pack all parameter tensors into one lane-dense (rows, 128) f32 buffer.

    Layout (each block starts at a sublane-aligned row offset, zero padded to 128 lanes):
      wih : (D, 4H)    whh : (H, 4H)    b  : (1, 4H)
      w1  : (H, L1)    b1  : (1, L1)
      w2  : (L1, L2)   stored in a full 128-row block so z(B,128) @ w2 needs no slicing
      b2  : (1, L2)
    """
    w_ih_t = params["w_ih_t"]; D, G = w_ih_t.shape          # G = 4H
    w_hh_t = params["w_hh_t"]; H = w_hh_t.shape[0]
    w1_t = params["w1_t"]; L1 = w1_t.shape[1]
    w2_t = params["w2_t"]; L2 = w2_t.shape[1]
    assert G == 4 * H and G <= _LANES and L1 <= _LANES and L2 <= _LANES

    blocks, offsets = [], {}
    cur = 0

    def add(name, arr, rows):
        nonlocal cur
        r, c = arr.shape
        blk = jnp.zeros((rows, _LANES), jnp.float32).at[:r, :c].set(arr.astype(jnp.float32))
        offsets[name] = cur
        cur += rows
        blocks.append(blk)

    add("wih", w_ih_t, _round_up(D, _SUBLANES))
    add("whh", w_hh_t, _round_up(H, _SUBLANES))
    add("b", params["b_lstm"], _SUBLANES)
    add("w1", w1_t, _round_up(H, _SUBLANES))
    add("b1", params["b1"], _SUBLANES)
    add("w2", w2_t, _LANES)                 # full 128 rows: z has 128 (zero-padded) lanes
    add("b2", params["b2"], _SUBLANES)

    packed = jnp.concatenate(blocks, axis=0)               # ~(248, 128) f32 ~ 124 KiB
    dims = dict(D=D, H=H, L1=L1, L2=L2)
    return packed, offsets, dims


# --------------------- fused LSTM + MLP kernel (single invocation) -------------------
def _fused_lstm_mlp_kernel(seq_ref, mask_ref, p_ref, o_ref, *,
                           T, B, H, D, L2,
                           off_wih, off_whh, off_b, off_w1, off_b1, off_w2, off_b2):
    """seq_ref: (T*B, D) time-major flattened sequence.
    mask_ref: (T*B, H) f32 validity mask (1.0 while t < length, else 0.0).
    p_ref:    packed parameter buffer (rows, 128)."""
    wih = p_ref[off_wih:off_wih + D, :]                    # (D, 128)  [4H lanes used]
    whh = p_ref[off_whh:off_whh + H, :]                    # (H, 128)
    b = p_ref[off_b:off_b + 1, :]                          # (1, 128)

    # Hoist the input projection for every time step out of the serial recurrence:
    # one (T*B, D) @ (D, 4H) matmul instead of T small ones on the critical path.
    xg = jnp.dot(seq_ref[...], wih, preferred_element_type=jnp.float32) + b   # (T*B, 128)

    # Precomputed per-step validity masks (hoisted out of the loop; no per-step compare
    # or lane broadcast on the critical path).
    mask = mask_ref[...]                                   # (T*B, H)

    h = jnp.zeros((B, H), jnp.float32)
    c = jnp.zeros((B, H), jnp.float32)

    # Fully unrolled static time loop (T is a compile-time constant).
    for t in range(T):
        # Sublane-aligned static slice of the precomputed x-projection (B multiple of 8).
        g = xg[t * B:(t + 1) * B, :] + jnp.dot(h, whh,
                                               preferred_element_type=jnp.float32)  # (B, 128)
        # Transcendentals once per step on the full lane-dense (B, 128) vreg.
        # EUP-friendly sigmoid: exp + approximate reciprocal both ride the EUP slot.
        sg = pl.reciprocal(1.0 + jnp.exp(-g), approx=True)
        tg = jnp.tanh(g)
        # Static lane windows for the individual gates (PyTorch order: i, f, g, o).
        i_g = sg[:, 0 * H:1 * H]
        f_g = sg[:, 1 * H:2 * H]
        g_g = tg[:, 2 * H:3 * H]
        o_g = sg[:, 3 * H:4 * H]

        c_new = f_g * c + i_g * g_g
        h_new = o_g * jnp.tanh(c_new)

        # pack_padded_sequence semantics: freeze state once t >= length[b] (arith blend).
        m = mask[t * B:(t + 1) * B, :]                     # (B, H) in {0, 1}
        c = c + m * (c_new - c)
        h = h + m * (h_new - h)

    # Fused MLP epilogue: Linear(H->L1) -> ReLU -> Linear(L1->L2), all lane-padded to 128
    # (padded lanes are exactly zero through the ReLU and contribute nothing to w2).
    w1 = p_ref[off_w1:off_w1 + H, :]                       # (H, 128)   [L1 lanes used]
    b1 = p_ref[off_b1:off_b1 + 1, :]                       # (1, 128)
    w2 = p_ref[off_w2:off_w2 + _LANES, :]                  # (128, 128) [L1 rows, L2 lanes]
    b2 = p_ref[off_b2:off_b2 + 1, :]                       # (1, 128)

    z = jnp.maximum(jnp.dot(h, w1, preferred_element_type=jnp.float32) + b1, 0.0)
    out = jnp.dot(z, w2, preferred_element_type=jnp.float32) + b2
    o_ref[...] = out[:, :L2].astype(o_ref.dtype)


# ------------------------------------ wrapper ---------------------------------------
def build_forward(params):
    """Returns a jitted forward fn mirroring MakeModel.forward for ['RnnBlock','Linear'].

    Params are packed once here (at init); the jitted forward fuses padding, transpose,
    mask construction and the pallas_call into a single executable.
    """
    packed, off, dims = _pack_params(params)
    D, H, L2 = dims["D"], dims["H"], dims["L2"]

    @jax.jit
    def forward(seq, lengths):
        B, T, _ = seq.shape
        # Pad the batch to a multiple of 8 sublanes; padded rows get length 0
        # (their state stays 0) and are sliced off at the end.
        B_pad = max(_SUBLANES, _round_up(B, _SUBLANES))
        seq_p = jnp.zeros((B_pad, T, D), jnp.float32).at[:B].set(seq.astype(jnp.float32))
        len_p = jnp.zeros((B_pad,), jnp.int32).at[:B].set(lengths.astype(jnp.int32))

        # Time-major, flattened to (T*B_pad, D) so the x-projection is one big matmul.
        seq_tb = jnp.transpose(seq_p, (1, 0, 2)).reshape(T * B_pad, D)

        # Hoisted validity masks for all steps: (T*B_pad, H) f32 in {0,1}.
        valid = (jnp.arange(T, dtype=jnp.int32)[:, None] < len_p[None, :]).astype(jnp.float32)
        mask_tb = jnp.broadcast_to(valid[:, :, None], (T, B_pad, H)).reshape(T * B_pad, H)

        kernel = functools.partial(
            _fused_lstm_mlp_kernel, T=T, B=B_pad, H=H, D=D, L2=L2,
            off_wih=off["wih"], off_whh=off["whh"], off_b=off["b"],
            off_w1=off["w1"], off_b1=off["b1"], off_w2=off["w2"], off_b2=off["b2"])

        vmem = pl.BlockSpec(memory_space=pltpu.MemorySpace.VMEM)
        out = pl.pallas_call(
            kernel,
            out_shape=jax.ShapeDtypeStruct((B_pad, L2), jnp.float32),
            in_specs=[vmem, vmem, vmem],
            out_specs=vmem,
        )(seq_tb, mask_tb, packed)
        return out[:B]

    return forward


# ------------------------------- pure-JAX reference ----------------------------------
def _reference(seq, lengths, p):
    B, T, D = seq.shape
    H = p["w_hh_t"].shape[0]
    seq_tbd = jnp.transpose(seq, (1, 0, 2))

    def step(carry, inp):
        h, c = carry
        x_t, t = inp
        g = x_t @ p["w_ih_t"] + h @ p["w_hh_t"] + p["b_lstm"]
        i = jax.nn.sigmoid(g[:, :H]); f = jax.nn.sigmoid(g[:, H:2 * H])
        gg = jnp.tanh(g[:, 2 * H:3 * H]); o = jax.nn.sigmoid(g[:, 3 * H:])
        c_new = f * c + i * gg
        h_new = o * jnp.tanh(c_new)
        m = (t < lengths)[:, None]
        return (jnp.where(m, h_new, h), jnp.where(m, c_new, c)), None

    (h, _), _ = jax.lax.scan(step,
                             (jnp.zeros((B, H)), jnp.zeros((B, H))),
                             (seq_tbd, jnp.arange(T)))
    y = jnp.maximum(h @ p["w1_t"] + p["b1"], 0.0)
    return y @ p["w2_t"] + p["b2"]


# ----------------------------------------- main ---------------------------------------
if __name__ == "__main__":
    B, T, D, H = 4, 8, 32, 32          # batch, seq, n_in, n_out (LSTM hidden)
    L1, L2 = 64, 16                    # Linear block: input_sizes = [32, 64, 16]

    key = jax.random.PRNGKey(0)
    ks = jax.random.split(key, 8)

    # LSTM params (PyTorch layout W_ih: (4H, D), W_hh: (4H, H)); stored transposed.
    scale = 1.0 / jnp.sqrt(H)
    w_ih = jax.random.uniform(ks[0], (4 * H, D), minval=-scale, maxval=scale)
    w_hh = jax.random.uniform(ks[1], (4 * H, H), minval=-scale, maxval=scale)
    b_ih = jax.random.uniform(ks[2], (4 * H,), minval=-scale, maxval=scale)
    b_hh = jax.random.uniform(ks[3], (4 * H,), minval=-scale, maxval=scale)

    # Linear params: kaiming-normal (fan_in, ReLU) weights.
    w1 = jax.random.normal(ks[4], (L1, H)) * jnp.sqrt(2.0 / H)
    b1 = jax.random.uniform(ks[5], (L1,), minval=-0.1, maxval=0.1)
    w2 = jax.random.normal(ks[6], (L2, L1)) * jnp.sqrt(2.0 / L1)
    b2 = jax.random.uniform(ks[7], (L2,), minval=-0.1, maxval=0.1)

    params = {
        "w_ih_t": w_ih.T.astype(jnp.float32),                  # (D, 4H)
        "w_hh_t": w_hh.T.astype(jnp.float32),                  # (H, 4H)
        "b_lstm": (b_ih + b_hh)[None, :].astype(jnp.float32),  # (1, 4H)
        "w1_t": w1.T.astype(jnp.float32), "b1": b1[None, :].astype(jnp.float32),
        "w2_t": w2.T.astype(jnp.float32), "b2": b2[None, :].astype(jnp.float32),
    }

    forward = build_forward(params)

    seq = jax.random.normal(jax.random.PRNGKey(42), (B, T, D), dtype=jnp.float32)
    lengths = jnp.array([8, 7, 5, 3], dtype=jnp.int32)   # descending (pack_padded)

    out = jax.block_until_ready(forward(seq, lengths))
    ref = jax.block_until_ready(_reference(seq, lengths, params))

    assert out.shape == (B, L2)
    # Tolerance relaxed vs. the pure-f32 version: the in-kernel sigmoid uses the EUP
    # approximate reciprocal (per perf review), which differs from exact sigmoid at the
    # ~1e-4 relative level and compounds slightly over the 8-step recurrence + MLP.
    assert jnp.allclose(out, ref, rtol=2e-2, atol=2e-2), "mismatch vs reference"

    print("KERNEL_OK")
</pallas_src>

<mosaic_0001>
module attributes {stable_mosaic.version = 11 : i64} {
  func.func @_fused_lstm_mlp_kernel(%arg0: memref<64x32xf32, #tpu.memory_space<vmem>>, %arg1: memref<64x32xf32, #tpu.memory_space<vmem>>, %arg2: memref<248x128xf32, #tpu.memory_space<vmem>>, %arg3: memref<8x16xf32, #tpu.memory_space<vmem>>) attributes {dimension_semantics = [], scalar_prefetch = 0 : i64, scratch_operands = 0 : i64, tpu.core_type = #tpu.core_type<tc>} {
    %c0 = arith.constant 0 : index
    %c0_0 = arith.constant 0 : index
    %0 = vector.load %arg2[%c0, %c0_0] : memref<248x128xf32, #tpu.memory_space<vmem>>, vector<32x128xf32>
    %c32 = arith.constant 32 : index
    %c0_1 = arith.constant 0 : index
    %1 = vector.load %arg2[%c32, %c0_1] : memref<248x128xf32, #tpu.memory_space<vmem>>, vector<32x128xf32>
    %c64 = arith.constant 64 : index
    %c0_2 = arith.constant 0 : index
    %2 = vector.load %arg2[%c64, %c0_2] : memref<248x128xf32, #tpu.memory_space<vmem>>, vector<1x128xf32>
    %c0_3 = arith.constant 0 : index
    %c0_4 = arith.constant 0 : index
    %3 = vector.load %arg0[%c0_3, %c0_4] : memref<64x32xf32, #tpu.memory_space<vmem>>, vector<64x32xf32>
    %cst = arith.constant dense<0.000000e+00> : vector<64x128xf32>
    %4 = tpu.matmul %3, %0, %cst {dimension_numbers = #tpu.dot_dimension_numbers<[1], [0], [0], [1], [0, 0, 1, 1], [], []>} : vector<64x32xf32>, vector<32x128xf32>, vector<64x128xf32> -> vector<64x128xf32>
    %5 = vector.broadcast %2 : vector<1x128xf32> to vector<64x128xf32>
    %6 = arith.addf %4, %5 : vector<64x128xf32>
    %c0_5 = arith.constant 0 : index
    %c0_6 = arith.constant 0 : index
    %7 = vector.load %arg1[%c0_5, %c0_6] : memref<64x32xf32, #tpu.memory_space<vmem>>, vector<64x32xf32>
    %cst_7 = arith.constant 0.000000e+00 : f32
    %8 = vector.broadcast %cst_7 : f32 to vector<8x32xf32>
    %cst_8 = arith.constant 0.000000e+00 : f32
    %9 = vector.broadcast %cst_8 : f32 to vector<8x32xf32>
    %10 = vector.extract_strided_slice %6 {offsets = [0, 0], sizes = [8, 128], strides = [1, 1]} : vector<64x128xf32> to vector<8x128xf32>
    %cst_9 = arith.constant dense<0.000000e+00> : vector<8x128xf32>
    %11 = tpu.matmul %8, %1, %cst_9 {dimension_numbers = #tpu.dot_dimension_numbers<[1], [0], [0], [1], [0, 0, 1, 1], [], []>} : vector<8x32xf32>, vector<32x128xf32>, vector<8x128xf32> -> vector<8x128xf32>
    %12 = arith.addf %10, %11 : vector<8x128xf32>
    %cst_10 = arith.constant 0.000000e+00 : f32
    %13 = vector.broadcast %cst_10 : f32 to vector<8x128xf32>
    %14 = arith.subf %13, %12 : vector<8x128xf32>
    %15 = math.exp %14 : vector<8x128xf32>
    %cst_11 = arith.constant 1.000000e+00 : f32
    %16 = vector.broadcast %cst_11 : f32 to vector<8x128xf32>
    %17 = arith.addf %16, %15 : vector<8x128xf32>
    %18 = tpu.reciprocal %17 {approx = true} : vector<8x128xf32> -> vector<8x128xf32>
    %19 = math.tanh %12 : vector<8x128xf32>
    %20 = vector.extract_strided_slice %18 {offsets = [0, 0], sizes = [8, 32], strides = [1, 1]} : vector<8x128xf32> to vector<8x32xf32>
    %21 = vector.extract_strided_slice %18 {offsets = [0, 32], sizes = [8, 32], strides = [1, 1]} : vector<8x128xf32> to vector<8x32xf32>
    %22 = vector.extract_strided_slice %19 {offsets = [0, 64], sizes = [8, 32], strides = [1, 1]} : vector<8x128xf32> to vector<8x32xf32>
    %23 = vector.extract_strided_slice %18 {offsets = [0, 96], sizes = [8, 32], strides = [1, 1]} : vector<8x128xf32> to vector<8x32xf32>
    %24 = arith.mulf %21, %9 : vector<8x32xf32>
    %25 = arith.mulf %20, %22 : vector<8x32xf32>
    %26 = arith.addf %24, %25 : vector<8x32xf32>
    %27 = math.tanh %26 : vector<8x32xf32>
    %28 = arith.mulf %23, %27 : vector<8x32xf32>
    %29 = vector.extract_strided_slice %7 {offsets = [0, 0], sizes = [8, 32], strides = [1, 1]} : vector<64x32xf32> to vector<8x32xf32>
    %30 = arith.subf %26, %9 : vector<8x32xf32>
    %31 = arith.mulf %29, %30 : vector<8x32xf32>
    %32 = arith.addf %9, %31 : vector<8x32xf32>
    %33 = arith.subf %28, %8 : vector<8x32xf32>
    %34 = arith.mulf %29, %33 : vector<8x32xf32>
    %35 = arith.addf %8, %34 : vector<8x32xf32>
    %36 = vector.extract_strided_slice %6 {offsets = [8, 0], sizes = [8, 128], strides = [1, 1]} : vector<64x128xf32> to vector<8x128xf32>
    %cst_12 = arith.constant dense<0.000000e+00> : vector<8x128xf32>
    %37 = tpu.matmul %35, %1, %cst_12 {dimension_numbers = #tpu.dot_dimension_numbers<[1], [0], [0], [1], [0, 0, 1, 1], [], []>} : vector<8x32xf32>, vector<32x128xf32>, vector<8x128xf32> -> vector<8x128xf32>
    %38 = arith.addf %36, %37 : vector<8x128xf32>
    %cst_13 = arith.constant 0.000000e+00 : f32
    %39 = vector.broadcast %cst_13 : f32 to vector<8x128xf32>
    %40 = arith.subf %39, %38 : vector<8x128xf32>
    %41 = math.exp %40 : vector<8x128xf32>
    %cst_14 = arith.constant 1.000000e+00 : f32
    %42 = vector.broadcast %cst_14 : f32 to vector<8x128xf32>
    %43 = arith.addf %42, %41 : vector<8x128xf32>
    %44 = tpu.reciprocal %43 {approx = true} : vector<8x128xf32> -> vector<8x128xf32>
    %45 = math.tanh %38 : vector<8x128xf32>
    %46 = vector.extract_strided_slice %44 {offsets = [0, 0], sizes = [8, 32], strides = [1, 1]} : vector<8x128xf32> to vector<8x32xf32>
    %47 = vector.extract_strided_slice %44 {offsets = [0, 32], sizes = [8, 32], strides = [1, 1]} : vector<8x128xf32> to vector<8x32xf32>
    %48 = vector.extract_strided_slice %45 {offsets = [0, 64], sizes = [8, 32], strides = [1, 1]} : vector<8x128xf32> to vector<8x32xf32>
    %49 = vector.extract_strided_slice %44 {offsets = [0, 96], sizes = [8, 32], strides = [1, 1]} : vector<8x128xf32> to vector<8x32xf32>
    %50 = arith.mulf %47, %32 : vector<8x32xf32>
    %51 = arith.mulf %46, %48 : vector<8x32xf32>
    %52 = arith.addf %50, %51 : vector<8x32xf32>
    %53 = math.tanh %52 : vector<8x32xf32>
    %54 = arith.mulf %49, %53 : vector<8x32xf32>
    %55 = vector.extract_strided_slice %7 {offsets = [8, 0], sizes = [8, 32], strides = [1, 1]} : vector<64x32xf32> to vector<8x32xf32>
    %56 = arith.subf %52, %32 : vector<8x32xf32>
    %57 = arith.mulf %55, %56 : vector<8x32xf32>
    %58 = arith.addf %32, %57 : vector<8x32xf32>
    %59 = arith.subf %54, %35 : vector<8x32xf32>
    %60 = arith.mulf %55, %59 : vector<8x32xf32>
    %61 = arith.addf %35, %60 : vector<8x32xf32>
    %62 = vector.extract_strided_slice %6 {offsets = [16, 0], sizes = [8, 128], strides = [1, 1]} : vector<64x128xf32> to vector<8x128xf32>
    %cst_15 = arith.constant dense<0.000000e+00> : vector<8x128xf32>
    %63 = tpu.matmul %61, %1, %cst_15 {dimension_numbers = #tpu.dot_dimension_numbers<[1], [0], [0], [1], [0, 0, 1, 1], [], []>} : vector<8x32xf32>, vector<32x128xf32>, vector<8x128xf32> -> vector<8x128xf32>
    %64 = arith.addf %62, %63 : vector<8x128xf32>
    %cst_16 = arith.constant 0.000000e+00 : f32
    %65 = vector.broadcast %cst_16 : f32 to vector<8x128xf32>
    %66 = arith.subf %65, %64 : vector<8x128xf32>
    %67 = math.exp %66 : vector<8x128xf32>
    %cst_17 = arith.constant 1.000000e+00 : f32
    %68 = vector.broadcast %cst_17 : f32 to vector<8x128xf32>
    %69 = arith.addf %68, %67 : vector<8x128xf32>
    %70 = tpu.reciprocal %69 {approx = true} : vector<8x128xf32> -> vector<8x128xf32>
    %71 = math.tanh %64 : vector<8x128xf32>
    %72 = vector.extract_strided_slice %70 {offsets = [0, 0], sizes = [8, 32], strides = [1, 1]} : vector<8x128xf32> to vector<8x32xf32>
    %73 = vector.extract_strided_slice %70 {offsets = [0, 32], sizes = [8, 32], strides = [1, 1]} : vector<8x128xf32> to vector<8x32xf32>
    %74 = vector.extract_strided_slice %71 {offsets = [0, 64], sizes = [8, 32], strides = [1, 1]} : vector<8x128xf32> to vector<8x32xf32>
    %75 = vector.extract_strided_slice %70 {offsets = [0, 96], sizes = [8, 32], strides = [1, 1]} : vector<8x128xf32> to vector<8x32xf32>
    %76 = arith.mulf %73, %58 : vector<8x32xf32>
    %77 = arith.mulf %72, %74 : vector<8x32xf32>
    %78 = arith.addf %76, %77 : vector<8x32xf32>
    %79 = math.tanh %78 : vector<8x32xf32>
    %80 = arith.mulf %75, %79 : vector<8x32xf32>
    %81 = vector.extract_strided_slice %7 {offsets = [16, 0], sizes = [8, 32], strides = [1, 1]} : vector<64x32xf32> to vector<8x32xf32>
    %82 = arith.subf %78, %58 : vector<8x32xf32>
    %83 = arith.mulf %81, %82 : vector<8x32xf32>
    %84 = arith.addf %58, %83 : vector<8x32xf32>
    %85 = arith.subf %80, %61 : vector<8x32xf32>
    %86 = arith.mulf %81, %85 : vector<8x32xf32>
    %87 = arith.addf %61, %86 : vector<8x32xf32>
    %88 = vector.extract_strided_slice %6 {offsets = [24, 0], sizes = [8, 128], strides = [1, 1]} : vector<64x128xf32> to vector<8x128xf32>
    %cst_18 = arith.constant dense<0.000000e+00> : vector<8x128xf32>
    %89 = tpu.matmul %87, %1, %cst_18 {dimension_numbers = #tpu.dot_dimension_numbers<[1], [0], [0], [1], [0, 0, 1, 1], [], []>} : vector<8x32xf32>, vector<32x128xf32>, vector<8x128xf32> -> vector<8x128xf32>
    %90 = arith.addf %88, %89 : vector<8x128xf32>
    %cst_19 = arith.constant 0.000000e+00 : f32
    %91 = vector.broadcast %cst_19 : f32 to vector<8x128xf32>
    %92 = arith.subf %91, %90 : vector<8x128xf32>
    %93 = math.exp %92 : vector<8x128xf32>
    %cst_20 = arith.constant 1.000000e+00 : f32
    %94 = vector.broadcast %cst_20 : f32 to vector<8x128xf32>
    %95 = arith.addf %94, %93 : vector<8x128xf32>
    %96 = tpu.reciprocal %95 {approx = true} : vector<8x128xf32> -> vector<8x128xf32>
    %97 = math.tanh %90 : vector<8x128xf32>
    %98 = vector.extract_strided_slice %96 {offsets = [0, 0], sizes = [8, 32], strides = [1, 1]} : vector<8x128xf32> to vector<8x32xf32>
    %99 = vector.extract_strided_slice %96 {offsets = [0, 32], sizes = [8, 32], strides = [1, 1]} : vector<8x128xf32> to vector<8x32xf32>
    %100 = vector.extract_strided_slice %97 {offsets = [0, 64], sizes = [8, 32], strides = [1, 1]} : vector<8x128xf32> to vector<8x32xf32>
    %101 = vector.extract_strided_slice %96 {offsets = [0, 96], sizes = [8, 32], strides = [1, 1]} : vector<8x128xf32> to vector<8x32xf32>
    %102 = arith.mulf %99, %84 : vector<8x32xf32>
    %103 = arith.mulf %98, %100 : vector<8x32xf32>
    %104 = arith.addf %102, %103 : vector<8x32xf32>
    %105 = math.tanh %104 : vector<8x32xf32>
    %106 = arith.mulf %101, %105 : vector<8x32xf32>
    %107 = vector.extract_strided_slice %7 {offsets = [24, 0], sizes = [8, 32], strides = [1, 1]} : vector<64x32xf32> to vector<8x32xf32>
    %108 = arith.subf %104, %84 : vector<8x32xf32>
    %109 = arith.mulf %107, %108 : vector<8x32xf32>
    %110 = arith.addf %84, %109 : vector<8x32xf32>
    %111 = arith.subf %106, %87 : vector<8x32xf32>
    %112 = arith.mulf %107, %111 : vector<8x32xf32>
    %113 = arith.addf %87, %112 : vector<8x32xf32>
    %114 = vector.extract_strided_slice %6 {offsets = [32, 0], sizes = [8, 128], strides = [1, 1]} : vector<64x128xf32> to vector<8x128xf32>
    %cst_21 = arith.constant dense<0.000000e+00> : vector<8x128xf32>
    %115 = tpu.matmul %113, %1, %cst_21 {dimension_numbers = #tpu.dot_dimension_numbers<[1], [0], [0], [1], [0, 0, 1, 1], [], []>} : vector<8x32xf32>, vector<32x128xf32>, vector<8x128xf32> -> vector<8x128xf32>
    %116 = arith.addf %114, %115 : vector<8x128xf32>
    %cst_22 = arith.constant 0.000000e+00 : f32
    %117 = vector.broadcast %cst_22 : f32 to vector<8x128xf32>
    %118 = arith.subf %117, %116 : vector<8x128xf32>
    %119 = math.exp %118 : vector<8x128xf32>
    %cst_23 = arith.constant 1.000000e+00 : f32
    %120 = vector.broadcast %cst_23 : f32 to vector<8x128xf32>
    %121 = arith.addf %120, %119 : vector<8x128xf32>
    %122 = tpu.reciprocal %121 {approx = true} : vector<8x128xf32> -> vector<8x128xf32>
    %123 = math.tanh %116 : vector<8x128xf32>
    %124 = vector.extract_strided_slice %122 {offsets = [0, 0], sizes = [8, 32], strides = [1, 1]} : vector<8x128xf32> to vector<8x32xf32>
    %125 = vector.extract_strided_slice %122 {offsets = [0, 32], sizes = [8, 32], strides = [1, 1]} : vector<8x128xf32> to vector<8x32xf32>
    %126 = vector.extract_strided_slice %123 {offsets = [0, 64], sizes = [8, 32], strides = [1, 1]} : vector<8x128xf32> to vector<8x32xf32>
    %127 = vector.extract_strided_slice %122 {offsets = [0, 96], sizes = [8, 32], strides = [1, 1]} : vector<8x128xf32> to vector<8x32xf32>
    %128 = arith.mulf %125, %110 : vector<8x32xf32>
    %129 = arith.mulf %124, %126 : vector<8x32xf32>
    %130 = arith.addf %128, %129 : vector<8x32xf32>
    %131 = math.tanh %130 : vector<8x32xf32>
    %132 = arith.mulf %127, %131 : vector<8x32xf32>
    %133 = vector.extract_strided_slice %7 {offsets = [32, 0], sizes = [8, 32], strides = [1, 1]} : vector<64x32xf32> to vector<8x32xf32>
    %134 = arith.subf %130, %110 : vector<8x32xf32>
    %135 = arith.mulf %133, %134 : vector<8x32xf32>
    %136 = arith.addf %110, %135 : vector<8x32xf32>
    %137 = arith.subf %132, %113 : vector<8x32xf32>
    %138 = arith.mulf %133, %137 : vector<8x32xf32>
    %139 = arith.addf %113, %138 : vector<8x32xf32>
    %140 = vector.extract_strided_slice %6 {offsets = [40, 0], sizes = [8, 128], strides = [1, 1]} : vector<64x128xf32> to vector<8x128xf32>
    %cst_24 = arith.constant dense<0.000000e+00> : vector<8x128xf32>
    %141 = tpu.matmul %139, %1, %cst_24 {dimension_numbers = #tpu.dot_dimension_numbers<[1], [0], [0], [1], [0, 0, 1, 1], [], []>} : vector<8x32xf32>, vector<32x128xf32>, vector<8x128xf32> -> vector<8x128xf32>
    %142 = arith.addf %140, %141 : vector<8x128xf32>
    %cst_25 = arith.constant 0.000000e+00 : f32
    %143 = vector.broadcast %cst_25 : f32 to vector<8x128xf32>
    %144 = arith.subf %143, %142 : vector<8x128xf32>
    %145 = math.exp %144 : vector<8x128xf32>
    %cst_26 = arith.constant 1.000000e+00 : f32
    %146 = vector.broadcast %cst_26 : f32 to vector<8x128xf32>
    %147 = arith.addf %146, %145 : vector<8x128xf32>
    %148 = tpu.reciprocal %147 {approx = true} : vector<8x128xf32> -> vector<8x128xf32>
    %149 = math.tanh %142 : vector<8x128xf32>
    %150 = vector.extract_strided_slice %148 {offsets = [0, 0], sizes = [8, 32], strides = [1, 1]} : vector<8x128xf32> to vector<8x32xf32>
    %151 = vector.extract_strided_slice %148 {offsets = [0, 32], sizes = [8, 32], strides = [1, 1]} : vector<8x128xf32> to vector<8x32xf32>
    %152 = vector.extract_strided_slice %149 {offsets = [0, 64], sizes = [8, 32], strides = [1, 1]} : vector<8x128xf32> to vector<8x32xf32>
    %153 = vector.extract_strided_slice %148 {offsets = [0, 96], sizes = [8, 32], strides = [1, 1]} : vector<8x128xf32> to vector<8x32xf32>
    %154 = arith.mulf %151, %136 : vector<8x32xf32>
    %155 = arith.mulf %150, %152 : vector<8x32xf32>
    %156 = arith.addf %154, %155 : vector<8x32xf32>
    %157 = math.tanh %156 : vector<8x32xf32>
    %158 = arith.mulf %153, %157 : vector<8x32xf32>
    %159 = vector.extract_strided_slice %7 {offsets = [40, 0], sizes = [8, 32], strides = [1, 1]} : vector<64x32xf32> to vector<8x32xf32>
    %160 = arith.subf %156, %136 : vector<8x32xf32>
    %161 = arith.mulf %159, %160 : vector<8x32xf32>
    %162 = arith.addf %136, %161 : vector<8x32xf32>
    %163 = arith.subf %158, %139 : vector<8x32xf32>
    %164 = arith.mulf %159, %163 : vector<8x32xf32>
    %165 = arith.addf %139, %164 : vector<8x32xf32>
    %166 = vector.extract_strided_slice %6 {offsets = [48, 0], sizes = [8, 128], strides = [1, 1]} : vector<64x128xf32> to vector<8x128xf32>
    %cst_27 = arith.constant dense<0.000000e+00> : vector<8x128xf32>
    %167 = tpu.matmul %165, %1, %cst_27 {dimension_numbers = #tpu.dot_dimension_numbers<[1], [0], [0], [1], [0, 0, 1, 1], [], []>} : vector<8x32xf32>, vector<32x128xf32>, vector<8x128xf32> -> vector<8x128xf32>
    %168 = arith.addf %166, %167 : vector<8x128xf32>
    %cst_28 = arith.constant 0.000000e+00 : f32
    %169 = vector.broadcast %cst_28 : f32 to vector<8x128xf32>
    %170 = arith.subf %169, %168 : vector<8x128xf32>
    %171 = math.exp %170 : vector<8x128xf32>
    %cst_29 = arith.constant 1.000000e+00 : f32
    %172 = vector.broadcast %cst_29 : f32 to vector<8x128xf32>
    %173 = arith.addf %172, %171 : vector<8x128xf32>
    %174 = tpu.reciprocal %173 {approx = true} : vector<8x128xf32> -> vector<8x128xf32>
    %175 = math.tanh %168 : vector<8x128xf32>
    %176 = vector.extract_strided_slice %174 {offsets = [0, 0], sizes = [8, 32], strides = [1, 1]} : vector<8x128xf32> to vector<8x32xf32>
    %177 = vector.extract_strided_slice %174 {offsets = [0, 32], sizes = [8, 32], strides = [1, 1]} : vector<8x128xf32> to vector<8x32xf32>
    %178 = vector.extract_strided_slice %175 {offsets = [0, 64], sizes = [8, 32], strides = [1, 1]} : vector<8x128xf32> to vector<8x32xf32>
    %179 = vector.extract_strided_slice %174 {offsets = [0, 96], sizes = [8, 32], strides = [1, 1]} : vector<8x128xf32> to vector<8x32xf32>
    %180 = arith.mulf %177, %162 : vector<8x32xf32>
    %181 = arith.mulf %176, %178 : vector<8x32xf32>
    %182 = arith.addf %180, %181 : vector<8x32xf32>
    %183 = math.tanh %182 : vector<8x32xf32>
    %184 = arith.mulf %179, %183 : vector<8x32xf32>
    %185 = vector.extract_strided_slice %7 {offsets = [48, 0], sizes = [8, 32], strides = [1, 1]} : vector<64x32xf32> to vector<8x32xf32>
    %186 = arith.subf %182, %162 : vector<8x32xf32>
    %187 = arith.mulf %185, %186 : vector<8x32xf32>
    %188 = arith.addf %162, %187 : vector<8x32xf32>
    %189 = arith.subf %184, %165 : vector<8x32xf32>
    %190 = arith.mulf %185, %189 : vector<8x32xf32>
    %191 = arith.addf %165, %190 : vector<8x32xf32>
    %192 = vector.extract_strided_slice %6 {offsets = [56, 0], sizes = [8, 128], strides = [1, 1]} : vector<64x128xf32> to vector<8x128xf32>
    %cst_30 = arith.constant dense<0.000000e+00> : vector<8x128xf32>
    %193 = tpu.matmul %191, %1, %cst_30 {dimension_numbers = #tpu.dot_dimension_numbers<[1], [0], [0], [1], [0, 0, 1, 1], [], []>} : vector<8x32xf32>, vector<32x128xf32>, vector<8x128xf32> -> vector<8x128xf32>
    %194 = arith.addf %192, %193 : vector<8x128xf32>
    %cst_31 = arith.constant 0.000000e+00 : f32
    %195 = vector.broadcast %cst_31 : f32 to vector<8x128xf32>
    %196 = arith.subf %195, %194 : vector<8x128xf32>
    %197 = math.exp %196 : vector<8x128xf32>
    %cst_32 = arith.constant 1.000000e+00 : f32
    %198 = vector.broadcast %cst_32 : f32 to vector<8x128xf32>
    %199 = arith.addf %198, %197 : vector<8x128xf32>
    %200 = tpu.reciprocal %199 {approx = true} : vector<8x128xf32> -> vector<8x128xf32>
    %201 = math.tanh %194 : vector<8x128xf32>
    %202 = vector.extract_strided_slice %200 {offsets = [0, 0], sizes = [8, 32], strides = [1, 1]} : vector<8x128xf32> to vector<8x32xf32>
    %203 = vector.extract_strided_slice %200 {offsets = [0, 32], sizes = [8, 32], strides = [1, 1]} : vector<8x128xf32> to vector<8x32xf32>
    %204 = vector.extract_strided_slice %201 {offsets = [0, 64], sizes = [8, 32], strides = [1, 1]} : vector<8x128xf32> to vector<8x32xf32>
    %205 = vector.extract_strided_slice %200 {offsets = [0, 96], sizes = [8, 32], strides = [1, 1]} : vector<8x128xf32> to vector<8x32xf32>
    %206 = arith.mulf %203, %188 : vector<8x32xf32>
    %207 = arith.mulf %202, %204 : vector<8x32xf32>
    %208 = arith.addf %206, %207 : vector<8x32xf32>
    %209 = math.tanh %208 : vector<8x32xf32>
    %210 = arith.mulf %205, %209 : vector<8x32xf32>
    %211 = vector.extract_strided_slice %7 {offsets = [56, 0], sizes = [8, 32], strides = [1, 1]} : vector<64x32xf32> to vector<8x32xf32>
    %212 = arith.subf %210, %191 : vector<8x32xf32>
    %213 = arith.mulf %211, %212 : vector<8x32xf32>
    %214 = arith.addf %191, %213 : vector<8x32xf32>
    %c72 = arith.constant 72 : index
    %c0_33 = arith.constant 0 : index
    %215 = vector.load %arg2[%c72, %c0_33] : memref<248x128xf32, #tpu.memory_space<vmem>>, vector<32x128xf32>
    %c104 = arith.constant 104 : index
    %c0_34 = arith.constant 0 : index
    %216 = vector.load %arg2[%c104, %c0_34] : memref<248x128xf32, #tpu.memory_space<vmem>>, vector<1x128xf32>
    %c112 = arith.constant 112 : index
    %c0_35 = arith.constant 0 : index
    %217 = vector.load %arg2[%c112, %c0_35] : memref<248x128xf32, #tpu.memory_space<vmem>>, vector<128x128xf32>
    %c240 = arith.constant 240 : index
    %c0_36 = arith.constant 0 : index
    %218 = vector.load %arg2[%c240, %c0_36] : memref<248x128xf32, #tpu.memory_space<vmem>>, vector<1x128xf32>
    %cst_37 = arith.constant dense<0.000000e+00> : vector<8x128xf32>
    %219 = tpu.matmul %214, %215, %cst_37 {dimension_numbers = #tpu.dot_dimension_numbers<[1], [0], [0], [1], [0, 0, 1, 1], [], []>} : vector<8x32xf32>, vector<32x128xf32>, vector<8x128xf32> -> vector<8x128xf32>
    %220 = vector.broadcast %216 : vector<1x128xf32> to vector<8x128xf32>
    %221 = arith.addf %219, %220 : vector<8x128xf32>
    %cst_38 = arith.constant 0.000000e+00 : f32
    %222 = vector.broadcast %cst_38 : f32 to vector<8x128xf32>
    %223 = arith.maximumf %221, %222 : vector<8x128xf32>
    %cst_39 = arith.constant dense<0.000000e+00> : vector<8x128xf32>
    %224 = tpu.matmul %223, %217, %cst_39 {dimension_numbers = #tpu.dot_dimension_numbers<[1], [0], [0], [1], [0, 0, 1, 1], [], []>} : vector<8x128xf32>, vector<128x128xf32>, vector<8x128xf32> -> vector<8x128xf32>
    %225 = vector.broadcast %218 : vector<1x128xf32> to vector<8x128xf32>
    %226 = arith.addf %224, %225 : vector<8x128xf32>
    %227 = vector.extract_strided_slice %226 {offsets = [0, 0], sizes = [8, 16], strides = [1, 1]} : vector<8x128xf32> to vector<8x16xf32>
    %c0_40 = arith.constant 0 : index
    %c0_41 = arith.constant 0 : index
    %228 = vector.load %arg3[%c0_40, %c0_41] : memref<8x16xf32, #tpu.memory_space<vmem>>, vector<8x16xf32>
    tpu.vector_store %arg3[%c0_40, %c0_41], %227 {strides = array<i32>} : memref<8x16xf32, #tpu.memory_space<vmem>>, vector<8x16xf32>,
    return
  }
}

</mosaic_0001>

<llo_original>
// kernel: forward.1
$region0: #{forward.1}
  #allocation0 [shape = 'u32[]', space=smem, size = 0x4, offset = 0x4, fixed_abs, tag = 'smem constant byte address 0x4 - core index']
  #allocation1 [shape = 'u32[144,128]{1,0:T(1,128)}', space=vmem, size = 0x12000, scoped, tag = 'internal scratch']
  %s0 = inlined_call_operand.vmem [shape: f32[64,32], index: 0, kind: input, shape index: {}]
  %s1 = inlined_call_operand.vmem [shape: f32[64,32], index: 1, kind: input, shape index: {}]
  %s2 = inlined_call_operand.vmem [shape: f32[248,128], index: 2, kind: input, shape index: {}]
  %s3 = inlined_call_operand.vmem [shape: f32[8,16], index: 3, kind: output, shape index: {}]
  %s4 = sld [smem:[#allocation0]]
  $region22: #{forward.1} parent=0
    _
  %s6 = ssub.s32 1, %s4
  %s7 = scalar_select 0, %s6, %s4
  // Predicated region
  $region2: #{forward.1} parent=0 // pred_check
    _
  $region3: #{forward.1} parent=0 // pred_check_branch
    %9 = sbr.rel (0) target = $region5
  $region4: #{forward.1} parent=0 // pred_region
    _
  $region5: #{forward.1} parent=0 // pred_fallthru
    _
  // Predicated region
  $region6: #{forward.1} parent=0 // pred_check
    _
  $region7: #{forward.1} parent=0 // pred_check_branch
    %11 = sbr.rel (0) target = $region9
  $region8: #{forward.1} parent=0 // pred_region
    _
  $region9: #{forward.1} parent=0 // pred_fallthru
    _
  // Predicated region
  $region10: #{forward.1} parent=0 // pred_check
    _
  $region11: #{forward.1} parent=0 // pred_check_branch
    %13 = sbr.rel (0) target = $region13
  $region12: #{forward.1} parent=0 // pred_region
    _
  $region13: #{forward.1} parent=0 // pred_fallthru
    _
  %v14 = vld [vmem:[%s2] sm:$0xff]
  %v15 = vld [vmem:[%s2 + $0x8] sm:$0xff]
  %v16 = vld [vmem:[%s2 + $0x10] sm:$0xff]
  %v17 = vld [vmem:[%s2 + $0x18] sm:$0xff]
  %v18 = vld [vmem:[%s2 + $0x20] sm:$0xff]
  %v19 = vld [vmem:[%s2 + $0x28] sm:$0xff]
  %v20 = vld [vmem:[%s2 + $0x30] sm:$0xff]
  %v21 = vld [vmem:[%s2 + $0x38] sm:$0xff]
  %v22 = vld [vmem:[%s2 + $0x40] sm:$0x1]
  %v23 = vld [vmem:[%s0] sm:$0xff]
  %v24 = vld [vmem:[%s0 + $0x8] sm:$0xff]
  %v25 = vld [vmem:[%s0 + $0x10] sm:$0xff]
  %v26 = vld [vmem:[%s0 + $0x18] sm:$0xff]
  %v27 = vld [vmem:[%s0 + $0x20] sm:$0xff]
  %v28 = vld [vmem:[%s0 + $0x28] sm:$0xff]
  %v29 = vld [vmem:[%s0 + $0x30] sm:$0xff]
  %v30 = vld [vmem:[%s0 + $0x38] sm:$0xff]
  %v31 = vlaneseq
  %v32 = vshrl.u32 %v31, 7
  %v33 = vsub.s32 0, %v32
  %v34 = vrot.slane %v22, %v33
  %vm35 = vcmask 261120
  %v37 = vsel %vm35, %v23, 0
  %v40 = vsel %vm35, %v24, 0
  %v43 = vsel %vm35, %v25, 0
  %v46 = vsel %vm35, %v26, 0
  %v49 = vsel %vm35, %v27, 0
  %v52 = vsel %vm35, %v28, 0
  %v55 = vsel %vm35, %v29, 0
  %v58 = vsel %vm35, %v30, 0
  %60 = vmatprep.subr.mxu0 0.0
  %61 = vmatpush1.msra.mxu0 0.0
  %62 = vmatprep.subr.mxu0 0.0
  %63 = vmatpush1.msra.mxu0 0.0
  %64 = vmatprep.subr.mxu0 0.0
  %65 = vmatpush1.msra.mxu0 0.0
  %66 = vmatprep.subr.mxu0 0.0
  %67 = vmatpush1.msra.mxu0 0.0
  %68 = vmatprep.subr.mxu0 0.0
  %69 = vmatpush1.msra.mxu0 0.0
  %70 = vmatprep.subr.mxu0 0.0
  %71 = vmatpush1.msra.mxu0 0.0
  %72 = vmatprep.subr.mxu0 0.0
  %73 = vmatpush1.msra.mxu0 0.0
  %74 = vmatprep.subr.mxu0 0.0
  %75 = vmatpush1.msra.mxu0 0.0
  %76 = vmatprep.subr.mxu0 0.0
  %77 = vmatpush1.msra.mxu0 0.0
  %78 = vmatprep.subr.mxu0 0.0
  %79 = vmatpush1.msra.mxu0 0.0
  %80 = vmatprep.subr.mxu0 0.0
  %81 = vmatpush1.msra.mxu0 0.0
  %82 = vmatprep.subr.mxu0 0.0
  %83 = vmatpush1.msra.mxu0 0.0
  %84 = vmatprep.subr.mxu0 0.0
  %85 = vmatpush1.msra.mxu0 %v17
  %86 = vmatprep.subr.mxu0 0.0
  %87 = vmatpush1.msra.mxu0 %v16
  %88 = vmatprep.subr.mxu0 0.0
  %89 = vmatpush1.msra.mxu0 %v15
  %90 = vmatprep.subr.mxu0 0.0
  %91 = vmatpush1.msra.mxu0 %v14
  %92 = vmatprep.subr.mxu0 0.0
  %93 = vmatpush2.msra.mxu0 0.0
  %94 = vmatprep.subr.mxu0 0.0
  %95 = vmatpush2.msra.mxu0 0.0
  %96 = vmatprep.subr.mxu0 0.0
  %97 = vmatpush2.msra.mxu0 0.0
  %98 = vmatprep.subr.mxu0 0.0
  %99 = vmatpush2.msra.mxu0 0.0
  %100 = vmatprep.subr.mxu0 0.0
  %101 = vmatpush2.msra.mxu0 0.0
  %102 = vmatprep.subr.mxu0 0.0
  %103 = vmatpush2.msra.mxu0 0.0
  %104 = vmatprep.subr.mxu0 0.0
  %105 = vmatpush2.msra.mxu0 0.0
  %106 = vmatprep.subr.mxu0 0.0
  %107 = vmatpush2.msra.mxu0 0.0
  %108 = vmatprep.subr.mxu0 0.0
  %109 = vmatpush2.msra.mxu0 0.0
  %110 = vmatprep.subr.mxu0 0.0
  %111 = vmatpush2.msra.mxu0 0.0
  %112 = vmatprep.subr.mxu0 0.0
  %113 = vmatpush2.msra.mxu0 0.0
  %114 = vmatprep.subr.mxu0 0.0
  %115 = vmatpush2.msra.mxu0 0.0
  %116 = vmatprep.subr.mxu0 0.0
  %117 = vmatpush2.msra.mxu0 0.0
  %118 = vmatprep.subr.mxu0 0.0
  %119 = vmatpush2.msra.mxu0 0.0
  %120 = vmatprep.subr.mxu0 0.0
  %121 = vmatpush2.msra.mxu0 0.0
  %122 = vmatprep.subr.mxu0 0.0
  %123 = vmatpush2.msra.mxu0 0.0
  %124 = vmatprep.mubr.f32.mxu0 0.0
  %125 = vmatmul.mubr.f32.gmra.mxu0 %v37
  %v126 = vpop.f32.mrf.mxu0
  %v127 = vadd.f32 %v34, %v126
  %v128 = vpop.f32.mrf.mxu0
  %129 = vmatprep.mubr.f32.mxu0 0.0
  %130 = vmatmul.mubr.f32.gmra.mxu0 %v40
  %v131 = vpop.f32.mrf.mxu0
  %v132 = vadd.f32 %v34, %v131
  %v133 = vpop.f32.mrf.mxu0
  %134 = vmatprep.mubr.f32.mxu0 0.0
  %135 = vmatmul.mubr.f32.gmra.mxu0 %v43
  %v136 = vpop.f32.mrf.mxu0
  %v137 = vadd.f32 %v34, %v136
  %v138 = vpop.f32.mrf.mxu0
  %139 = vmatprep.mubr.f32.mxu0 0.0
  %140 = vmatmul.mubr.f32.gmra.mxu0 %v46
  %v141 = vpop.f32.mrf.mxu0
  %v142 = vadd.f32 %v34, %v141
  %v143 = vpop.f32.mrf.mxu0
  %144 = vmatprep.mubr.f32.mxu0 0.0
  %145 = vmatmul.mubr.f32.gmra.mxu0 %v49
  %v146 = vpop.f32.mrf.mxu0
  %v147 = vadd.f32 %v34, %v146
  %v148 = vpop.f32.mrf.mxu0
  %149 = vmatprep.mubr.f32.mxu0 0.0
  %150 = vmatmul.mubr.f32.gmra.mxu0 %v52
  %v151 = vpop.f32.mrf.mxu0
  %v152 = vadd.f32 %v34, %v151
  %v153 = vpop.f32.mrf.mxu0
  %154 = vmatprep.mubr.f32.mxu0 0.0
  %155 = vmatmul.mubr.f32.gmra.mxu0 %v55
  %v156 = vpop.f32.mrf.mxu0
  %v157 = vadd.f32 %v34, %v156
  %v158 = vpop.f32.mrf.mxu0
  %159 = vmatprep.mubr.f32.mxu0 0.0
  %160 = vmatmul.mubr.f32.gmra.mxu0 %v58
  %v161 = vpop.f32.mrf.mxu0
  %v162 = vadd.f32 %v34, %v161
  %v163 = vpop.f32.mrf.mxu0
  %164 = vdwg.mxu0
  %v165 = vld [vmem:[%s1] sm:$0xff]
  %v166 = vld [vmem:[%s1 + $0x8] sm:$0xff]
  %v167 = vld [vmem:[%s1 + $0x10] sm:$0xff]
  %v168 = vld [vmem:[%s1 + $0x18] sm:$0xff]
  %v169 = vld [vmem:[%s1 + $0x20] sm:$0xff]
  %v170 = vld [vmem:[%s1 + $0x28] sm:$0xff]
  %v171 = vld [vmem:[%s1 + $0x30] sm:$0xff]
  %v172 = vld [vmem:[%s1 + $0x38] sm:$0xff]
  %v174 = vsel %vm35, 0.0, 0
  %176 = vmatprep.subr.mxu0 0.0
  %177 = vmatpush1.msra.mxu0 0.0
  %178 = vmatprep.subr.mxu0 0.0
  %179 = vmatpush1.msra.mxu0 0.0
  %180 = vmatprep.subr.mxu0 0.0
  %181 = vmatpush1.msra.mxu0 0.0
  %182 = vmatprep.subr.mxu0 0.0
  %183 = vmatpush1.msra.mxu0 0.0
  %184 = vmatprep.subr.mxu0 0.0
  %185 = vmatpush1.msra.mxu0 0.0
  %186 = vmatprep.subr.mxu0 0.0
  %187 = vmatpush1.msra.mxu0 0.0
  %188 = vmatprep.subr.mxu0 0.0
  %189 = vmatpush1.msra.mxu0 0.0
  %190 = vmatprep.subr.mxu0 0.0
  %191 = vmatpush1.msra.mxu0 0.0
  %192 = vmatprep.subr.mxu0 0.0
  %193 = vmatpush1.msra.mxu0 0.0
  %194 = vmatprep.subr.mxu0 0.0
  %195 = vmatpush1.msra.mxu0 0.0
  %196 = vmatprep.subr.mxu0 0.0
  %197 = vmatpush1.msra.mxu0 0.0
  %198 = vmatprep.subr.mxu0 0.0
  %199 = vmatpush1.msra.mxu0 0.0
  %200 = vmatprep.subr.mxu0 0.0
  %201 = vmatpush1.msra.mxu0 %v21
  %202 = vmatprep.subr.mxu0 0.0
  %203 = vmatpush1.msra.mxu0 %v20
  %204 = vmatprep.subr.mxu0 0.0
  %205 = vmatpush1.msra.mxu0 %v19
  %206 = vmatprep.subr.mxu0 0.0
  %207 = vmatpush1.msra.mxu0 %v18
  %208 = vmatprep.subr.mxu0 0.0
  %209 = vmatpush2.msra.mxu0 0.0
  %210 = vmatprep.subr.mxu0 0.0
  %211 = vmatpush2.msra.mxu0 0.0
  %212 = vmatprep.subr.mxu0 0.0
  %213 = vmatpush2.msra.mxu0 0.0
  %214 = vmatprep.subr.mxu0 0.0
  %215 = vmatpush2.msra.mxu0 0.0
  %216 = vmatprep.subr.mxu0 0.0
  %217 = vmatpush2.msra.mxu0 0.0
  %218 = vmatprep.subr.mxu0 0.0
  %219 = vmatpush2.msra.mxu0 0.0
  %220 = vmatprep.subr.mxu0 0.0
  %221 = vmatpush2.msra.mxu0 0.0
  %222 = vmatprep.subr.mxu0 0.0
  %223 = vmatpush2.msra.mxu0 0.0
  %224 = vmatprep.subr.mxu0 0.0
  %225 = vmatpush2.msra.mxu0 0.0
  %226 = vmatprep.subr.mxu0 0.0
  %227 = vmatpush2.msra.mxu0 0.0
  %228 = vmatprep.subr.mxu0 0.0
  %229 = vmatpush2.msra.mxu0 0.0
  %230 = vmatprep.subr.mxu0 0.0
  %231 = vmatpush2.msra.mxu0 0.0
  %232 = vmatprep.subr.mxu0 0.0
  %233 = vmatpush2.msra.mxu0 0.0
  %234 = vmatprep.subr.mxu0 0.0
  %235 = vmatpush2.msra.mxu0 0.0
  %236 = vmatprep.subr.mxu0 0.0
  %237 = vmatpush2.msra.mxu0 0.0
  %238 = vmatprep.subr.mxu0 0.0
  %239 = vmatpush2.msra.mxu0 0.0
  %240 = vmatprep.mubr.f32.mxu0 0.0
  %241 = vmatmul.mubr.f32.gmra.mxu0 %v174
  %v242 = vpop.f32.mrf.mxu0
  %v243 = vadd.f32 0.0, %v242
  %v244 = vpop.f32.mrf.mxu0
  %245 = vdwg.mxu0
  %v246 = vadd.f32 %v127, %v243
  %v247 = vsub.f32 0.0, %v246
  %v248 = vmul.f32 %v247, 1.442695
  %v249 = vpow.pop %v248
  %v250 = vadd.f32 %v249, 1.0
  %v251 = vrcp.pop %v250
  %v252 = vtanh.pop %v246
  %v253 = vmul.f32 %v251, 0.0
  %255 = vrot.lane.b32.xlu0 %v252, 64
  %v256 = vpop.permute.xlu0 %255
  %v258 = vmul.f32 %v251, %v256
  %260 = vrot.lane.b32.xlu0 %v258, 32
  %v261 = vpop.permute.xlu0 %260
  %v263 = vadd.f32 %v253, %v261
  %v264 = vtanh.pop %v263
  %266 = vrot.lane.b32.xlu0 %v264, 64
  %v267 = vpop.permute.xlu0 %266
  %v269 = vmul.f32 %v251, %v267
  %271 = vrot.lane.b32.xlu0 %v263, 96
  %v272 = vpop.permute.xlu0 %271
  %v274 = vmul.f32 %v165, %v272
  %v275 = vadd.f32 %v274, 0.0
  %277 = vrot.lane.b32.xlu0 %v269, 32
  %v278 = vpop.permute.xlu0 %277
  %v280 = vmul.f32 %v165, %v278
  %v281 = vadd.f32 %v280, 0.0
  %v283 = vsel %vm35, %v281, 0
  %285 = vmatprep.subr.mxu0 0.0
  %286 = vmatpush1.msra.mxu0 0.0
  %287 = vmatprep.subr.mxu0 0.0
  %288 = vmatpush1.msra.mxu0 0.0
  %289 = vmatprep.subr.mxu0 0.0
  %290 = vmatpush1.msra.mxu0 0.0
  %291 = vmatprep.subr.mxu0 0.0
  %292 = vmatpush1.msra.mxu0 0.0
  %293 = vmatprep.subr.mxu0 0.0
  %294 = vmatpush1.msra.mxu0 0.0
  %295 = vmatprep.subr.mxu0 0.0
  %296 = vmatpush1.msra.mxu0 0.0
  %297 = vmatprep.subr.mxu0 0.0
  %298 = vmatpush1.msra.mxu0 0.0
  %299 = vmatprep.subr.mxu0 0.0
  %300 = vmatpush1.msra.mxu0 0.0
  %301 = vmatprep.subr.mxu0 0.0
  %302 = vmatpush1.msra.mxu0 0.0
  %303 = vmatprep.subr.mxu0 0.0
  %304 = vmatpush1.msra.mxu0 0.0
  %305 = vmatprep.subr.mxu0 0.0
  %306 = vmatpush1.msra.mxu0 0.0
  %307 = vmatprep.subr.mxu0 0.0
  %308 = vmatpush1.msra.mxu0 0.0
  %309 = vmatprep.subr.mxu0 0.0
  %310 = vmatpush1.msra.mxu0 %v21
  %311 = vmatprep.subr.mxu0 0.0
  %312 = vmatpush1.msra.mxu0 %v20
  %313 = vmatprep.subr.mxu0 0.0
  %314 = vmatpush1.msra.mxu0 %v19
  %315 = vmatprep.subr.mxu0 0.0
  %316 = vmatpush1.msra.mxu0 %v18
  %317 = vmatprep.subr.mxu0 0.0
  %318 = vmatpush2.msra.mxu0 0.0
  %319 = vmatprep.subr.mxu0 0.0
  %320 = vmatpush2.msra.mxu0 0.0
  %321 = vmatprep.subr.mxu0 0.0
  %322 = vmatpush2.msra.mxu0 0.0
  %323 = vmatprep.subr.mxu0 0.0
  %324 = vmatpush2.msra.mxu0 0.0
  %325 = vmatprep.subr.mxu0 0.0
  %326 = vmatpush2.msra.mxu0 0.0
  %327 = vmatprep.subr.mxu0 0.0
  %328 = vmatpush2.msra.mxu0 0.0
  %329 = vmatprep.subr.mxu0 0.0
  %330 = vmatpush2.msra.mxu0 0.0
  %331 = vmatprep.subr.mxu0 0.0
  %332 = vmatpush2.msra.mxu0 0.0
  %333 = vmatprep.subr.mxu0 0.0
  %334 = vmatpush2.msra.mxu0 0.0
  %335 = vmatprep.subr.mxu0 0.0
  %336 = vmatpush2.msra.mxu0 0.0
  %337 = vmatprep.subr.mxu0 0.0
  %338 = vmatpush2.msra.mxu0 0.0
  %339 = vmatprep.subr.mxu0 0.0
  %340 = vmatpush2.msra.mxu0 0.0
  %341 = vmatprep.subr.mxu0 0.0
  %342 = vmatpush2.msra.mxu0 0.0
  %343 = vmatprep.subr.mxu0 0.0
  %344 = vmatpush2.msra.mxu0 0.0
  %345 = vmatprep.subr.mxu0 0.0
  %346 = vmatpush2.msra.mxu0 0.0
  %347 = vmatprep.subr.mxu0 0.0
  %348 = vmatpush2.msra.mxu0 0.0
  %349 = vmatprep.mubr.f32.mxu0 0.0
  %350 = vmatmul.mubr.f32.gmra.mxu0 %v283
  %v351 = vpop.f32.mrf.mxu0
  %v352 = vadd.f32 0.0, %v351
  %v353 = vpop.f32.mrf.mxu0
  %354 = vdwg.mxu0
  %v355 = vadd.f32 %v132, %v352
  %v356 = vsub.f32 0.0, %v355
  %v357 = vmul.f32 %v356, 1.442695
  %v358 = vpow.pop %v357
  %v359 = vadd.f32 %v358, 1.0
  %v360 = vrcp.pop %v359
  %v361 = vtanh.pop %v355
  %363 = vrot.lane.b32.xlu0 %v275, 32
  %v364 = vpop.permute.xlu0 %363
  %v366 = vmul.f32 %v360, %v364
  %368 = vrot.lane.b32.xlu0 %v361, 64
  %v369 = vpop.permute.xlu0 %368
  %v371 = vmul.f32 %v360, %v369
  %373 = vrot.lane.b32.xlu0 %v371, 32
  %v374 = vpop.permute.xlu0 %373
  %v376 = vadd.f32 %v366, %v374
  %v377 = vtanh.pop %v376
  %379 = vrot.lane.b32.xlu0 %v377, 64
  %v380 = vpop.permute.xlu0 %379
  %v382 = vmul.f32 %v360, %v380
  %v383 = vsub.f32 %v376, %v364
  %385 = vrot.lane.b32.xlu0 %v383, 96
  %v386 = vpop.permute.xlu0 %385
  %v388 = vmul.f32 %v166, %v386
  %v389 = vadd.f32 %v275, %v388
  %390 = vrot.lane.b32.xlu0 %v281, 96
  %v391 = vpop.permute.xlu0 %390
  %v393 = vsub.f32 %v382, %v391
  %395 = vrot.lane.b32.xlu0 %v393, 32
  %v396 = vpop.permute.xlu0 %395
  %v398 = vmul.f32 %v166, %v396
  %v399 = vadd.f32 %v281, %v398
  %v401 = vsel %vm35, %v399, 0
  %403 = vmatprep.subr.mxu0 0.0
  %404 = vmatpush1.msra.mxu0 0.0
  %405 = vmatprep.subr.mxu0 0.0
  %406 = vmatpush1.msra.mxu0 0.0
  %407 = vmatprep.subr.mxu0 0.0
  %408 = vmatpush1.msra.mxu0 0.0
  %409 = vmatprep.subr.mxu0 0.0
  %410 = vmatpush1.msra.mxu0 0.0
  %411 = vmatprep.subr.mxu0 0.0
  %412 = vmatpush1.msra.mxu0 0.0
  %413 = vmatprep.subr.mxu0 0.0
  %414 = vmatpush1.msra.mxu0 0.0
  %415 = vmatprep.subr.mxu0 0.0
  %416 = vmatpush1.msra.mxu0 0.0
  %417 = vmatprep.subr.mxu0 0.0
  %418 = vmatpush1.msra.mxu0 0.0
  %419 = vmatprep.subr.mxu0 0.0
  %420 = vmatpush1.msra.mxu0 0.0
  %421 = vmatprep.subr.mxu0 0.0
  %422 = vmatpush1.msra.mxu0 0.0
  %423 = vmatprep.subr.mxu0 0.0
  %424 = vmatpush1.msra.mxu0 0.0
  %425 = vmatprep.subr.mxu0 0.0
  %426 = vmatpush1.msra.mxu0 0.0
  %427 = vmatprep.subr.mxu0 0.0
  %428 = vmatpush1.msra.mxu0 %v21
  %429 = vmatprep.subr.mxu0 0.0
  %430 = vmatpush1.msra.mxu0 %v20
  %431 = vmatprep.subr.mxu0 0.0
  %432 = vmatpush1.msra.mxu0 %v19
  %433 = vmatprep.subr.mxu0 0.0
  %434 = vmatpush1.msra.mxu0 %v18
  %435 = vmatprep.subr.mxu0 0.0
  %436 = vmatpush2.msra.mxu0 0.0
  %437 = vmatprep.subr.mxu0 0.0
  %438 = vmatpush2.msra.mxu0 0.0
  %439 = vmatprep.subr.mxu0 0.0
  %440 = vmatpush2.msra.mxu0 0.0
  %441 = vmatprep.subr.mxu0 0.0
  %442 = vmatpush2.msra.mxu0 0.0
  %443 = vmatprep.subr.mxu0 0.0
  %444 = vmatpush2.msra.mxu0 0.0
  %445 = vmatprep.subr.mxu0 0.0
  %446 = vmatpush2.msra.mxu0 0.0
  %447 = vmatprep.subr.mxu0 0.0
  %448 = vmatpush2.msra.mxu0 0.0
  %449 = vmatprep.subr.mxu0 0.0
  %450 = vmatpush2.msra.mxu0 0.0
  %451 = vmatprep.subr.mxu0 0.0
  %452 = vmatpush2.msra.mxu0 0.0
  %453 = vmatprep.subr.mxu0 0.0
  %454 = vmatpush2.msra.mxu0 0.0
  %455 = vmatprep.subr.mxu0 0.0
  %456 = vmatpush2.msra.mxu0 0.0
  %457 = vmatprep.subr.mxu0 0.0
  %458 = vmatpush2.msra.mxu0 0.0
  %459 = vmatprep.subr.mxu0 0.0
  %460 = vmatpush2.msra.mxu0 0.0
  %461 = vmatprep.subr.mxu0 0.0
  %462 = vmatpush2.msra.mxu0 0.0
  %463 = vmatprep.subr.mxu0 0.0
  %464 = vmatpush2.msra.mxu0 0.0
  %465 = vmatprep.subr.mxu0 0.0
  %466 = vmatpush2.msra.mxu0 0.0
  %467 = vmatprep.mubr.f32.mxu0 0.0
  %468 = vmatmul.mubr.f32.gmra.mxu0 %v401
  %v469 = vpop.f32.mrf.mxu0
  %v470 = vadd.f32 0.0, %v469
  %v471 = vpop.f32.mrf.mxu0
  %472 = vdwg.mxu0
  %v473 = vadd.f32 %v137, %v470
  %v474 = vsub.f32 0.0, %v473
  %v475 = vmul.f32 %v474, 1.442695
  %v476 = vpow.pop %v475
  %v477 = vadd.f32 %v476, 1.0
  %v478 = vrcp.pop %v477
  %v479 = vtanh.pop %v473
  %481 = vrot.lane.b32.xlu0 %v389, 32
  %v482 = vpop.permute.xlu0 %481
  %v484 = vmul.f32 %v478, %v482
  %486 = vrot.lane.b32.xlu0 %v479, 64
  %v487 = vpop.permute.xlu0 %486
  %v489 = vmul.f32 %v478, %v487
  %491 = vrot.lane.b32.xlu0 %v489, 32
  %v492 = vpop.permute.xlu0 %491
  %v494 = vadd.f32 %v484, %v492
  %v495 = vtanh.pop %v494
  %497 = vrot.lane.b32.xlu0 %v495, 64
  %v498 = vpop.permute.xlu0 %497
  %v500 = vmul.f32 %v478, %v498
  %v501 = vsub.f32 %v494, %v482
  %503 = vrot.lane.b32.xlu0 %v501, 96
  %v504 = vpop.permute.xlu0 %503
  %v506 = vmul.f32 %v167, %v504
  %v507 = vadd.f32 %v389, %v506
  %508 = vrot.lane.b32.xlu0 %v399, 96
  %v509 = vpop.permute.xlu0 %508
  %v511 = vsub.f32 %v500, %v509
  %513 = vrot.lane.b32.xlu0 %v511, 32
  %v514 = vpop.permute.xlu0 %513
  %v516 = vmul.f32 %v167, %v514
  %v517 = vadd.f32 %v399, %v516
  %v519 = vsel %vm35, %v517, 0
  %521 = vmatprep.subr.mxu0 0.0
  %522 = vmatpush1.msra.mxu0 0.0
  %523 = vmatprep.subr.mxu0 0.0
  %524 = vmatpush1.msra.mxu0 0.0
  %525 = vmatprep.subr.mxu0 0.0
  %526 = vmatpush1.msra.mxu0 0.0
  %527 = vmatprep.subr.mxu0 0.0
  %528 = vmatpush1.msra.mxu0 0.0
  %529 = vmatprep.subr.mxu0 0.0
  %530 = vmatpush1.msra.mxu0 0.0
  %531 = vmatprep.subr.mxu0 0.0
  %532 = vmatpush1.msra.mxu0 0.0
  %533 = vmatprep.subr.mxu0 0.0
  %534 = vmatpush1.msra.mxu0 0.0
  %535 = vmatprep.subr.mxu0 0.0
  %536 = vmatpush1.msra.mxu0 0.0
  %537 = vmatprep.subr.mxu0 0.0
  %538 = vmatpush1.msra.mxu0 0.0
  %539 = vmatprep.subr.mxu0 0.0
  %540 = vmatpush1.msra.mxu0 0.0
  %541 = vmatprep.subr.mxu0 0.0
  %542 = vmatpush1.msra.mxu0 0.0
  %543 = vmatprep.subr.mxu0 0.0
  %544 = vmatpush1.msra.mxu0 0.0
  %545 = vmatprep.subr.mxu0 0.0
  %546 = vmatpush1.msra.mxu0 %v21
  %547 = vmatprep.subr.mxu0 0.0
  %548 = vmatpush1.msra.mxu0 %v20
  %549 = vmatprep.subr.mxu0 0.0
  %550 = vmatpush1.msra.mxu0 %v19
  %551 = vmatprep.subr.mxu0 0.0
  %552 = vmatpush1.msra.mxu0 %v18
  %553 = vmatprep.subr.mxu0 0.0
  %554 = vmatpush2.msra.mxu0 0.0
  %555 = vmatprep.subr.mxu0 0.0
  %556 = vmatpush2.msra.mxu0 0.0
  %557 = vmatprep.subr.mxu0 0.0
  %558 = vmatpush2.msra.mxu0 0.0
  %559 = vmatprep.subr.mxu0 0.0
  %560 = vmatpush2.msra.mxu0 0.0
  %561 = vmatprep.subr.mxu0 0.0
  %562 = vmatpush2.msra.mxu0 0.0
  %563 = vmatprep.subr.mxu0 0.0
  %564 = vmatpush2.msra.mxu0 0.0
  %565 = vmatprep.subr.mxu0 0.0
  %566 = vmatpush2.msra.mxu0 0.0
  %567 = vmatprep.subr.mxu0 0.0
  %568 = vmatpush2.msra.mxu0 0.0
  %569 = vmatprep.subr.mxu0 0.0
  %570 = vmatpush2.msra.mxu0 0.0
  %571 = vmatprep.subr.mxu0 0.0
  %572 = vmatpush2.msra.mxu0 0.0
  %573 = vmatprep.subr.mxu0 0.0
  %574 = vmatpush2.msra.mxu0 0.0
  %575 = vmatprep.subr.mxu0 0.0
  %576 = vmatpush2.msra.mxu0 0.0
  %577 = vmatprep.subr.mxu0 0.0
  %578 = vmatpush2.msra.mxu0 0.0
  %579 = vmatprep.subr.mxu0 0.0
  %580 = vmatpush2.msra.mxu0 0.0
  %581 = vmatprep.subr.mxu0 0.0
  %582 = vmatpush2.msra.mxu0 0.0
  %583 = vmatprep.subr.mxu0 0.0
  %584 = vmatpush2.msra.mxu0 0.0
  %585 = vmatprep.mubr.f32.mxu0 0.0
  %586 = vmatmul.mubr.f32.gmra.mxu0 %v519
  %v587 = vpop.f32.mrf.mxu0
  %v588 = vadd.f32 0.0, %v587
  %v589 = vpop.f32.mrf.mxu0
  %590 = vdwg.mxu0
  %v591 = vadd.f32 %v142, %v588
  %v592 = vsub.f32 0.0, %v591
  %v593 = vmul.f32 %v592, 1.442695
  %v594 = vpow.pop %v593
  %v595 = vadd.f32 %v594, 1.0
  %v596 = vrcp.pop %v595
  %v597 = vtanh.pop %v591
  %599 = vrot.lane.b32.xlu0 %v507, 32
  %v600 = vpop.permute.xlu0 %599
  %v602 = vmul.f32 %v596, %v600
  %604 = vrot.lane.b32.xlu0 %v597, 64
  %v605 = vpop.permute.xlu0 %604
  %v607 = vmul.f32 %v596, %v605
  %609 = vrot.lane.b32.xlu0 %v607, 32
  %v610 = vpop.permute.xlu0 %609
  %v612 = vadd.f32 %v602, %v610
  %v613 = vtanh.pop %v612
  %615 = vrot.lane.b32.xlu0 %v613, 64
  %v616 = vpop.permute.xlu0 %615
  %v618 = vmul.f32 %v596, %v616
  %v619 = vsub.f32 %v612, %v600
  %621 = vrot.lane.b32.xlu0 %v619, 96
  %v622 = vpop.permute.xlu0 %621
  %v624 = vmul.f32 %v168, %v622
  %v625 = vadd.f32 %v507, %v624
  %626 = vrot.lane.b32.xlu0 %v517, 96
  %v627 = vpop.permute.xlu0 %626
  %v629 = vsub.f32 %v618, %v627
  %631 = vrot.lane.b32.xlu0 %v629, 32
  %v632 = vpop.permute.xlu0 %631
  %v634 = vmul.f32 %v168, %v632
  %v635 = vadd.f32 %v517, %v634
  %v637 = vsel %vm35, %v635, 0
  %639 = vmatprep.subr.mxu0 0.0
  %640 = vmatpush1.msra.mxu0 0.0
  %641 = vmatprep.subr.mxu0 0.0
  %642 = vmatpush1.msra.mxu0 0.0
  %643 = vmatprep.subr.mxu0 0.0
  %644 = vmatpush1.msra.mxu0 0.0
  %645 = vmatprep.subr.mxu0 0.0
  %646 = vmatpush1.msra.mxu0 0.0
  %647 = vmatprep.subr.mxu0 0.0
  %648 = vmatpush1.msra.mxu0 0.0
  %649 = vmatprep.subr.mxu0 0.0
  %650 = vmatpush1.msra.mxu0 0.0
  %651 = vmatprep.subr.mxu0 0.0
  %652 = vmatpush1.msra.mxu0 0.0
  %653 = vmatprep.subr.mxu0 0.0
  %654 = vmatpush1.msra.mxu0 0.0
  %655 = vmatprep.subr.mxu0 0.0
  %656 = vmatpush1.msra.mxu0 0.0
  %657 = vmatprep.subr.mxu0 0.0
  %658 = vmatpush1.msra.mxu0 0.0
  %659 = vmatprep.subr.mxu0 0.0
  %660 = vmatpush1.msra.mxu0 0.0
  %661 = vmatprep.subr.mxu0 0.0
  %662 = vmatpush1.msra.mxu0 0.0
  %663 = vmatprep.subr.mxu0 0.0
  %664 = vmatpush1.msra.mxu0 %v21
  %665 = vmatprep.subr.mxu0 0.0
  %666 = vmatpush1.msra.mxu0 %v20
  %667 = vmatprep.subr.mxu0 0.0
  %668 = vmatpush1.msra.mxu0 %v19
  %669 = vmatprep.subr.mxu0 0.0
  %670 = vmatpush1.msra.mxu0 %v18
  %671 = vmatprep.subr.mxu0 0.0
  %672 = vmatpush2.msra.mxu0 0.0
  %673 = vmatprep.subr.mxu0 0.0
  %674 = vmatpush2.msra.mxu0 0.0
  %675 = vmatprep.subr.mxu0 0.0
  %676 = vmatpush2.msra.mxu0 0.0
  %677 = vmatprep.subr.mxu0 0.0
  %678 = vmatpush2.msra.mxu0 0.0
  %679 = vmatprep.subr.mxu0 0.0
  %680 = vmatpush2.msra.mxu0 0.0
  %681 = vmatprep.subr.mxu0 0.0
  %682 = vmatpush2.msra.mxu0 0.0
  %683 = vmatprep.subr.mxu0 0.0
  %684 = vmatpush2.msra.mxu0 0.0
  %685 = vmatprep.subr.mxu0 0.0
  %686 = vmatpush2.msra.mxu0 0.0
  %687 = vmatprep.subr.mxu0 0.0
  %688 = vmatpush2.msra.mxu0 0.0
  %689 = vmatprep.subr.mxu0 0.0
  %690 = vmatpush2.msra.mxu0 0.0
  %691 = vmatprep.subr.mxu0 0.0
  %692 = vmatpush2.msra.mxu0 0.0
  %693 = vmatprep.subr.mxu0 0.0
  %694 = vmatpush2.msra.mxu0 0.0
  %695 = vmatprep.subr.mxu0 0.0
  %696 = vmatpush2.msra.mxu0 0.0
  %697 = vmatprep.subr.mxu0 0.0
  %698 = vmatpush2.msra.mxu0 0.0
  %699 = vmatprep.subr.mxu0 0.0
  %700 = vmatpush2.msra.mxu0 0.0
  %701 = vmatprep.subr.mxu0 0.0
  %702 = vmatpush2.msra.mxu0 0.0
  %703 = vmatprep.mubr.f32.mxu0 0.0
  %704 = vmatmul.mubr.f32.gmra.mxu0 %v637
  %v705 = vpop.f32.mrf.mxu0
  %v706 = vadd.f32 0.0, %v705
  %v707 = vpop.f32.mrf.mxu0
  %708 = vdwg.mxu0
  %v709 = vadd.f32 %v147, %v706
  %v710 = vsub.f32 0.0, %v709
  %v711 = vmul.f32 %v710, 1.442695
  %v712 = vpow.pop %v711
  %v713 = vadd.f32 %v712, 1.0
  %v714 = vrcp.pop %v713
  %v715 = vtanh.pop %v709
  %717 = vrot.lane.b32.xlu0 %v625, 32
  %v718 = vpop.permute.xlu0 %717
  %v720 = vmul.f32 %v714, %v718
  %722 = vrot.lane.b32.xlu0 %v715, 64
  %v723 = vpop.permute.xlu0 %722
  %v725 = vmul.f32 %v714, %v723
  %727 = vrot.lane.b32.xlu0 %v725, 32
  %v728 = vpop.permute.xlu0 %727
  %v730 = vadd.f32 %v720, %v728
  %v731 = vtanh.pop %v730
  %733 = vrot.lane.b32.xlu0 %v731, 64
  %v734 = vpop.permute.xlu0 %733
  %v736 = vmul.f32 %v714, %v734
  %v737 = vsub.f32 %v730, %v718
  %739 = vrot.lane.b32.xlu0 %v737, 96
  %v740 = vpop.permute.xlu0 %739
  %v742 = vmul.f32 %v169, %v740
  %v743 = vadd.f32 %v625, %v742
  %744 = vrot.lane.b32.xlu0 %v635, 96
  %v745 = vpop.permute.xlu0 %744
  %v747 = vsub.f32 %v736, %v745
  %749 = vrot.lane.b32.xlu0 %v747, 32
  %v750 = vpop.permute.xlu0 %749
  %v752 = vmul.f32 %v169, %v750
  %v753 = vadd.f32 %v635, %v752
  %v755 = vsel %vm35, %v753, 0
  %757 = vmatprep.subr.mxu0 0.0
  %758 = vmatpush1.msra.mxu0 0.0
  %759 = vmatprep.subr.mxu0 0.0
  %760 = vmatpush1.msra.mxu0 0.0
  %761 = vmatprep.subr.mxu0 0.0
  %762 = vmatpush1.msra.mxu0 0.0
  %763 = vmatprep.subr.mxu0 0.0
  %764 = vmatpush1.msra.mxu0 0.0
  %765 = vmatprep.subr.mxu0 0.0
  %766 = vmatpush1.msra.mxu0 0.0
  %767 = vmatprep.subr.mxu0 0.0
  %768 = vmatpush1.msra.mxu0 0.0
  %769 = vmatprep.subr.mxu0 0.0
  %770 = vmatpush1.msra.mxu0 0.0
  %771 = vmatprep.subr.mxu0 0.0
  %772 = vmatpush1.msra.mxu0 0.0
  %773 = vmatprep.subr.mxu0 0.0
  %774 = vmatpush1.msra.mxu0 0.0
  %775 = vmatprep.subr.mxu0 0.0
  %776 = vmatpush1.msra.mxu0 0.0
  %777 = vmatprep.subr.mxu0 0.0
  %778 = vmatpush1.msra.mxu0 0.0
  %779 = vmatprep.subr.mxu0 0.0
  %780 = vmatpush1.msra.mxu0 0.0
  %781 = vmatprep.subr.mxu0 0.0
  %782 = vmatpush1.msra.mxu0 %v21
  %783 = vmatprep.subr.mxu0 0.0
  %784 = vmatpush1.msra.mxu0 %v20
  %785 = vmatprep.subr.mxu0 0.0
  %786 = vmatpush1.msra.mxu0 %v19
  %787 = vmatprep.subr.mxu0 0.0
  %788 = vmatpush1.msra.mxu0 %v18
  %789 = vmatprep.subr.mxu0 0.0
  %790 = vmatpush2.msra.mxu0 0.0
  %791 = vmatprep.subr.mxu0 0.0
  %792 = vmatpush2.msra.mxu0 0.0
  %793 = vmatprep.subr.mxu0 0.0
  %794 = vmatpush2.msra.mxu0 0.0
  %795 = vmatprep.subr.mxu0 0.0
  %796 = vmatpush2.msra.mxu0 0.0
  %797 = vmatprep.subr.mxu0 0.0
  %798 = vmatpush2.msra.mxu0 0.0
  %799 = vmatprep.subr.mxu0 0.0
  %800 = vmatpush2.msra.mxu0 0.0
  %801 = vmatprep.subr.mxu0 0.0
  %802 = vmatpush2.msra.mxu0 0.0
  %803 = vmatprep.subr.mxu0 0.0
  %804 = vmatpush2.msra.mxu0 0.0
  %805 = vmatprep.subr.mxu0 0.0
  %806 = vmatpush2.msra.mxu0 0.0
  %807 = vmatprep.subr.mxu0 0.0
  %808 = vmatpush2.msra.mxu0 0.0
  %809 = vmatprep.subr.mxu0 0.0
  %810 = vmatpush2.msra.mxu0 0.0
  %811 = vmatprep.subr.mxu0 0.0
  %812 = vmatpush2.msra.mxu0 0.0
  %813 = vmatprep.subr.mxu0 0.0
  %814 = vmatpush2.msra.mxu0 0.0
  %815 = vmatprep.subr.mxu0 0.0
  %816 = vmatpush2.msra.mxu0 0.0
  %817 = vmatprep.subr.mxu0 0.0
  %818 = vmatpush2.msra.mxu0 0.0
  %819 = vmatprep.subr.mxu0 0.0
  %820 = vmatpush2.msra.mxu0 0.0
  %821 = vmatprep.mubr.f32.mxu0 0.0
  %822 = vmatmul.mubr.f32.gmra.mxu0 %v755
  %v823 = vpop.f32.mrf.mxu0
  %v824 = vadd.f32 0.0, %v823
  %v825 = vpop.f32.mrf.mxu0
  %826 = vdwg.mxu0
  %v827 = vadd.f32 %v152, %v824
  %v828 = vsub.f32 0.0, %v827
  %v829 = vmul.f32 %v828, 1.442695
  %v830 = vpow.pop %v829
  %v831 = vadd.f32 %v830, 1.0
  %v832 = vrcp.pop %v831
  %v833 = vtanh.pop %v827
  %835 = vrot.lane.b32.xlu0 %v743, 32
  %v836 = vpop.permute.xlu0 %835
  %v838 = vmul.f32 %v832, %v836
  %840 = vrot.lane.b32.xlu0 %v833, 64
  %v841 = vpop.permute.xlu0 %840
  %v843 = vmul.f32 %v832, %v841
  %845 = vrot.lane.b32.xlu0 %v843, 32
  %v846 = vpop.permute.xlu0 %845
  %v848 = vadd.f32 %v838, %v846
  %v849 = vtanh.pop %v848
  %851 = vrot.lane.b32.xlu0 %v849, 64
  %v852 = vpop.permute.xlu0 %851
  %v854 = vmul.f32 %v832, %v852
  %v855 = vsub.f32 %v848, %v836
  %857 = vrot.lane.b32.xlu0 %v855, 96
  %v858 = vpop.permute.xlu0 %857
  %v860 = vmul.f32 %v170, %v858
  %v861 = vadd.f32 %v743, %v860
  %862 = vrot.lane.b32.xlu0 %v753, 96
  %v863 = vpop.permute.xlu0 %862
  %v865 = vsub.f32 %v854, %v863
  %867 = vrot.lane.b32.xlu0 %v865, 32
  %v868 = vpop.permute.xlu0 %867
  %v870 = vmul.f32 %v170, %v868
  %v871 = vadd.f32 %v753, %v870
  %v873 = vsel %vm35, %v871, 0
  %875 = vmatprep.subr.mxu0 0.0
  %876 = vmatpush1.msra.mxu0 0.0
  %877 = vmatprep.subr.mxu0 0.0
  %878 = vmatpush1.msra.mxu0 0.0
  %879 = vmatprep.subr.mxu0 0.0
  %880 = vmatpush1.msra.mxu0 0.0
  %881 = vmatprep.subr.mxu0 0.0
  %882 = vmatpush1.msra.mxu0 0.0
  %883 = vmatprep.subr.mxu0 0.0
  %884 = vmatpush1.msra.mxu0 0.0
  %885 = vmatprep.subr.mxu0 0.0
  %886 = vmatpush1.msra.mxu0 0.0
  %887 = vmatprep.subr.mxu0 0.0
  %888 = vmatpush1.msra.mxu0 0.0
  %889 = vmatprep.subr.mxu0 0.0
  %890 = vmatpush1.msra.mxu0 0.0
  %891 = vmatprep.subr.mxu0 0.0
  %892 = vmatpush1.msra.mxu0 0.0
  %893 = vmatprep.subr.mxu0 0.0
  %894 = vmatpush1.msra.mxu0 0.0
  %895 = vmatprep.subr.mxu0 0.0
  %896 = vmatpush1.msra.mxu0 0.0
  %897 = vmatprep.subr.mxu0 0.0
  %898 = vmatpush1.msra.mxu0 0.0
  %899 = vmatprep.subr.mxu0 0.0
  %900 = vmatpush1.msra.mxu0 %v21
  %901 = vmatprep.subr.mxu0 0.0
  %902 = vmatpush1.msra.mxu0 %v20
  %903 = vmatprep.subr.mxu0 0.0
  %904 = vmatpush1.msra.mxu0 %v19
  %905 = vmatprep.subr.mxu0 0.0
  %906 = vmatpush1.msra.mxu0 %v18
  %907 = vmatprep.subr.mxu0 0.0
  %908 = vmatpush2.msra.mxu0 0.0
  %909 = vmatprep.subr.mxu0 0.0
  %910 = vmatpush2.msra.mxu0 0.0
  %911 = vmatprep.subr.mxu0 0.0
  %912 = vmatpush2.msra.mxu0 0.0
  %913 = vmatprep.subr.mxu0 0.0
  %914 = vmatpush2.msra.mxu0 0.0
  %915 = vmatprep.subr.mxu0 0.0
  %916 = vmatpush2.msra.mxu0 0.0
  %917 = vmatprep.subr.mxu0 0.0
  %918 = vmatpush2.msra.mxu0 0.0
  %919 = vmatprep.subr.mxu0 0.0
  %920 = vmatpush2.msra.mxu0 0.0
  %921 = vmatprep.subr.mxu0 0.0
  %922 = vmatpush2.msra.mxu0 0.0
  %923 = vmatprep.subr.mxu0 0.0
  %924 = vmatpush2.msra.mxu0 0.0
  %925 = vmatprep.subr.mxu0 0.0
  %926 = vmatpush2.msra.mxu0 0.0
  %927 = vmatprep.subr.mxu0 0.0
  %928 = vmatpush2.msra.mxu0 0.0
  %929 = vmatprep.subr.mxu0 0.0
  %930 = vmatpush2.msra.mxu0 0.0
  %931 = vmatprep.subr.mxu0 0.0
  %932 = vmatpush2.msra.mxu0 0.0
  %933 = vmatprep.subr.mxu0 0.0
  %934 = vmatpush2.msra.mxu0 0.0
  %935 = vmatprep.subr.mxu0 0.0
  %936 = vmatpush2.msra.mxu0 0.0
  %937 = vmatprep.subr.mxu0 0.0
  %938 = vmatpush2.msra.mxu0 0.0
  %939 = vmatprep.mubr.f32.mxu0 0.0
  %940 = vmatmul.mubr.f32.gmra.mxu0 %v873
  %v941 = vpop.f32.mrf.mxu0
  %v942 = vadd.f32 0.0, %v941
  %v943 = vpop.f32.mrf.mxu0
  %944 = vdwg.mxu0
  %v945 = vadd.f32 %v157, %v942
  %v946 = vsub.f32 0.0, %v945
  %v947 = vmul.f32 %v946, 1.442695
  %v948 = vpow.pop %v947
  %v949 = vadd.f32 %v948, 1.0
  %v950 = vrcp.pop %v949
  %v951 = vtanh.pop %v945
  %953 = vrot.lane.b32.xlu0 %v861, 32
  %v954 = vpop.permute.xlu0 %953
  %v956 = vmul.f32 %v950, %v954
  %958 = vrot.lane.b32.xlu0 %v951, 64
  %v959 = vpop.permute.xlu0 %958
  %v961 = vmul.f32 %v950, %v959
  %963 = vrot.lane.b32.xlu0 %v961, 32
  %v964 = vpop.permute.xlu0 %963
  %v966 = vadd.f32 %v956, %v964
  %v967 = vtanh.pop %v966
  %969 = vrot.lane.b32.xlu0 %v967, 64
  %v970 = vpop.permute.xlu0 %969
  %v972 = vmul.f32 %v950, %v970
  %v973 = vsub.f32 %v966, %v954
  %975 = vrot.lane.b32.xlu0 %v973, 96
  %v976 = vpop.permute.xlu0 %975
  %v978 = vmul.f32 %v171, %v976
  %v979 = vadd.f32 %v861, %v978
  %980 = vrot.lane.b32.xlu0 %v871, 96
  %v981 = vpop.permute.xlu0 %980
  %v983 = vsub.f32 %v972, %v981
  %985 = vrot.lane.b32.xlu0 %v983, 32
  %v986 = vpop.permute.xlu0 %985
  %v988 = vmul.f32 %v171, %v986
  %v989 = vadd.f32 %v871, %v988
  %v991 = vsel %vm35, %v989, 0
  %993 = vmatprep.subr.mxu0 0.0
  %994 = vmatpush1.msra.mxu0 0.0
  %995 = vmatprep.subr.mxu0 0.0
  %996 = vmatpush1.msra.mxu0 0.0
  %997 = vmatprep.subr.mxu0 0.0
  %998 = vmatpush1.msra.mxu0 0.0
  %999 = vmatprep.subr.mxu0 0.0
  %1000 = vmatpush1.msra.mxu0 0.0
  %1001 = vmatprep.subr.mxu0 0.0
  %1002 = vmatpush1.msra.mxu0 0.0
  %1003 = vmatprep.subr.mxu0 0.0
  %1004 = vmatpush1.msra.mxu0 0.0
  %1005 = vmatprep.subr.mxu0 0.0
  %1006 = vmatpush1.msra.mxu0 0.0
  %1007 = vmatprep.subr.mxu0 0.0
  %1008 = vmatpush1.msra.mxu0 0.0
  %1009 = vmatprep.subr.mxu0 0.0
  %1010 = vmatpush1.msra.mxu0 0.0
  %1011 = vmatprep.subr.mxu0 0.0
  %1012 = vmatpush1.msra.mxu0 0.0
  %1013 = vmatprep.subr.mxu0 0.0
  %1014 = vmatpush1.msra.mxu0 0.0
  %1015 = vmatprep.subr.mxu0 0.0
  %1016 = vmatpush1.msra.mxu0 0.0
  %1017 = vmatprep.subr.mxu0 0.0
  %1018 = vmatpush1.msra.mxu0 %v21
  %1019 = vmatprep.subr.mxu0 0.0
  %1020 = vmatpush1.msra.mxu0 %v20
  %1021 = vmatprep.subr.mxu0 0.0
  %1022 = vmatpush1.msra.mxu0 %v19
  %1023 = vmatprep.subr.mxu0 0.0
  %1024 = vmatpush1.msra.mxu0 %v18
  %1025 = vmatprep.subr.mxu0 0.0
  %1026 = vmatpush2.msra.mxu0 0.0
  %1027 = vmatprep.subr.mxu0 0.0
  %1028 = vmatpush2.msra.mxu0 0.0
  %1029 = vmatprep.subr.mxu0 0.0
  %1030 = vmatpush2.msra.mxu0 0.0
  %1031 = vmatprep.subr.mxu0 0.0
  %1032 = vmatpush2.msra.mxu0 0.0
  %1033 = vmatprep.subr.mxu0 0.0
  %1034 = vmatpush2.msra.mxu0 0.0
  %1035 = vmatprep.subr.mxu0 0.0
  %1036 = vmatpush2.msra.mxu0 0.0
  %1037 = vmatprep.subr.mxu0 0.0
  %1038 = vmatpush2.msra.mxu0 0.0
  %1039 = vmatprep.subr.mxu0 0.0
  %1040 = vmatpush2.msra.mxu0 0.0
  %1041 = vmatprep.subr.mxu0 0.0
  %1042 = vmatpush2.msra.mxu0 0.0
  %1043 = vmatprep.subr.mxu0 0.0
  %1044 = vmatpush2.msra.mxu0 0.0
  %1045 = vmatprep.subr.mxu0 0.0
  %1046 = vmatpush2.msra.mxu0 0.0
  %1047 = vmatprep.subr.mxu0 0.0
  %1048 = vmatpush2.msra.mxu0 0.0
  %1049 = vmatprep.subr.mxu0 0.0
  %1050 = vmatpush2.msra.mxu0 0.0
  %1051 = vmatprep.subr.mxu0 0.0
  %1052 = vmatpush2.msra.mxu0 0.0
  %1053 = vmatprep.subr.mxu0 0.0
  %1054 = vmatpush2.msra.mxu0 0.0
  %1055 = vmatprep.subr.mxu0 0.0
  %1056 = vmatpush2.msra.mxu0 0.0
  %1057 = vmatprep.mubr.f32.mxu0 0.0
  %1058 = vmatmul.mubr.f32.gmra.mxu0 %v991
  %v1059 = vpop.f32.mrf.mxu0
  %v1060 = vadd.f32 0.0, %v1059
  %v1061 = vpop.f32.mrf.mxu0
  %1062 = vdwg.mxu0
  %v1063 = vadd.f32 %v162, %v1060
  %v1064 = vsub.f32 0.0, %v1063
  %v1065 = vmul.f32 %v1064, 1.442695
  %v1066 = vpow.pop %v1065
  %v1067 = vadd.f32 %v1066, 1.0
  %v1068 = vrcp.pop %v1067
  %v1069 = vtanh.pop %v1063
  %1071 = vrot.lane.b32.xlu0 %v979, 32
  %v1072 = vpop.permute.xlu0 %1071
  %v1074 = vmul.f32 %v1068, %v1072
  %1076 = vrot.lane.b32.xlu0 %v1069, 64
  %v1077 = vpop.permute.xlu0 %1076
  %v1079 = vmul.f32 %v1068, %v1077
  %1081 = vrot.lane.b32.xlu0 %v1079, 32
  %v1082 = vpop.permute.xlu0 %1081
  %v1084 = vadd.f32 %v1074, %v1082
  %v1085 = vtanh.pop %v1084
  %1087 = vrot.lane.b32.xlu0 %v1085, 64
  %v1088 = vpop.permute.xlu0 %1087
  %v1090 = vmul.f32 %v1068, %v1088
  %1091 = vrot.lane.b32.xlu0 %v989, 96
  %v1092 = vpop.permute.xlu0 %1091
  %v1094 = vsub.f32 %v1090, %v1092
  %1096 = vrot.lane.b32.xlu0 %v1094, 32
  %v1097 = vpop.permute.xlu0 %1096
  %v1099 = vmul.f32 %v172, %v1097
  %v1100 = vadd.f32 %v989, %v1099
  %v1101 = vld [vmem:[%s2 + $0x48] sm:$0xff]
  %v1102 = vld [vmem:[%s2 + $0x50] sm:$0xff]
  %v1103 = vld [vmem:[%s2 + $0x58] sm:$0xff]
  %v1104 = vld [vmem:[%s2 + $0x60] sm:$0xff]
  %v1105 = vld [vmem:[%s2 + $0x68] sm:$0x1]
  %v1106 = vld [vmem:[%s2 + $0x70] sm:$0xff]
  %v1107 = vld [vmem:[%s2 + $0x78] sm:$0xff]
  %v1108 = vld [vmem:[%s2 + $0x80] sm:$0xff]
  %v1109 = vld [vmem:[%s2 + $0x88] sm:$0xff]
  %v1110 = vld [vmem:[%s2 + $0x90] sm:$0xff]
  %v1111 = vld [vmem:[%s2 + $0x98] sm:$0xff]
  %v1112 = vld [vmem:[%s2 + $0xa0] sm:$0xff]
  %v1113 = vld [vmem:[%s2 + $0xa8] sm:$0xff]
  %v1114 = vld [vmem:[%s2 + $0xb0] sm:$0xff]
  %v1115 = vld [vmem:[%s2 + $0xb8] sm:$0xff]
  %v1116 = vld [vmem:[%s2 + $0xc0] sm:$0xff]
  %v1117 = vld [vmem:[%s2 + $0xc8] sm:$0xff]
  %v1118 = vld [vmem:[%s2 + $0xd0] sm:$0xff]
  %v1119 = vld [vmem:[%s2 + $0xd8] sm:$0xff]
  %v1120 = vld [vmem:[%s2 + $0xe0] sm:$0xff]
  %v1121 = vld [vmem:[%s2 + $0xe8] sm:$0xff]
  %v1122 = vld [vmem:[%s2 + $0xf0] sm:$0x1]
  %v1123 = vlaneseq
  %v1124 = vshrl.u32 %v1123, 7
  %v1125 = vsub.s32 0, %v1124
  %v1126 = vrot.slane %v1105, %v1125
  %v1128 = vsel %vm35, %v1100, 0
  %1130 = vmatprep.subr.mxu0 0.0
  %1131 = vmatpush1.msra.mxu0 0.0
  %1132 = vmatprep.subr.mxu0 0.0
  %1133 = vmatpush1.msra.mxu0 0.0
  %1134 = vmatprep.subr.mxu0 0.0
  %1135 = vmatpush1.msra.mxu0 0.0
  %1136 = vmatprep.subr.mxu0 0.0
  %1137 = vmatpush1.msra.mxu0 0.0
  %1138 = vmatprep.subr.mxu0 0.0
  %1139 = vmatpush1.msra.mxu0 0.0
  %1140 = vmatprep.subr.mxu0 0.0
  %1141 = vmatpush1.msra.mxu0 0.0
  %1142 = vmatprep.subr.mxu0 0.0
  %1143 = vmatpush1.msra.mxu0 0.0
  %1144 = vmatprep.subr.mxu0 0.0
  %1145 = vmatpush1.msra.mxu0 0.0
  %1146 = vmatprep.subr.mxu0 0.0
  %1147 = vmatpush1.msra.mxu0 0.0
  %1148 = vmatprep.subr.mxu0 0.0
  %1149 = vmatpush1.msra.mxu0 0.0
  %1150 = vmatprep.subr.mxu0 0.0
  %1151 = vmatpush1.msra.mxu0 0.0
  %1152 = vmatprep.subr.mxu0 0.0
  %1153 = vmatpush1.msra.mxu0 0.0
  %1154 = vmatprep.subr.mxu0 0.0
  %1155 = vmatpush1.msra.mxu0 %v1104
  %1156 = vmatprep.subr.mxu0 0.0
  %1157 = vmatpush1.msra.mxu0 %v1103
  %1158 = vmatprep.subr.mxu0 0.0
  %1159 = vmatpush1.msra.mxu0 %v1102
  %1160 = vmatprep.subr.mxu0 0.0
  %1161 = vmatpush1.msra.mxu0 %v1101
  %1162 = vmatprep.subr.mxu0 0.0
  %1163 = vmatpush2.msra.mxu0 0.0
  %1164 = vmatprep.subr.mxu0 0.0
  %1165 = vmatpush2.msra.mxu0 0.0
  %1166 = vmatprep.subr.mxu0 0.0
  %1167 = vmatpush2.msra.mxu0 0.0
  %1168 = vmatprep.subr.mxu0 0.0
  %1169 = vmatpush2.msra.mxu0 0.0
  %1170 = vmatprep.subr.mxu0 0.0
  %1171 = vmatpush2.msra.mxu0 0.0
  %1172 = vmatprep.subr.mxu0 0.0
  %1173 = vmatpush2.msra.mxu0 0.0
  %1174 = vmatprep.subr.mxu0 0.0
  %1175 = vmatpush2.msra.mxu0 0.0
  %1176 = vmatprep.subr.mxu0 0.0
  %1177 = vmatpush2.msra.mxu0 0.0
  %1178 = vmatprep.subr.mxu0 0.0
  %1179 = vmatpush2.msra.mxu0 0.0
  %1180 = vmatprep.subr.mxu0 0.0
  %1181 = vmatpush2.msra.mxu0 0.0
  %1182 = vmatprep.subr.mxu0 0.0
  %1183 = vmatpush2.msra.mxu0 0.0
  %1184 = vmatprep.subr.mxu0 0.0
  %1185 = vmatpush2.msra.mxu0 0.0
  %1186 = vmatprep.subr.mxu0 0.0
  %1187 = vmatpush2.msra.mxu0 0.0
  %1188 = vmatprep.subr.mxu0 0.0
  %1189 = vmatpush2.msra.mxu0 0.0
  %1190 = vmatprep.subr.mxu0 0.0
  %1191 = vmatpush2.msra.mxu0 0.0
  %1192 = vmatprep.subr.mxu0 0.0
  %1193 = vmatpush2.msra.mxu0 0.0
  %1194 = vmatprep.mubr.f32.mxu0 0.0
  %1195 = vmatmul.mubr.f32.gmra.mxu0 %v1128
  %v1196 = vpop.f32.mrf.mxu0
  %v1197 = vadd.f32 %v1126, %v1196
  %v1198 = vpop.f32.mrf.mxu0
  %1199 = vdwg.mxu0
  %v1200 = vmax.f32 %v1197, 0.0
  %v1201 = vlaneseq
  %v1202 = vshrl.u32 %v1201, 7
  %v1203 = vsub.s32 0, %v1202
  %v1204 = vrot.slane %v1122, %v1203
  %1205 = vmatprep.subr.mxu0 0.0
  %1206 = vmatpush1.msra.mxu0 %v1121
  %1207 = vmatprep.subr.mxu0 0.0
  %1208 = vmatpush1.msra.mxu0 %v1120
  %1209 = vmatprep.subr.mxu0 0.0
  %1210 = vmatpush1.msra.mxu0 %v1119
  %1211 = vmatprep.subr.mxu0 0.0
  %1212 = vmatpush1.msra.mxu0 %v1118
  %1213 = vmatprep.subr.mxu0 0.0
  %1214 = vmatpush1.msra.mxu0 %v1117
  %1215 = vmatprep.subr.mxu0 0.0
  %1216 = vmatpush1.msra.mxu0 %v1116
  %1217 = vmatprep.subr.mxu0 0.0
  %1218 = vmatpush1.msra.mxu0 %v1115
  %1219 = vmatprep.subr.mxu0 0.0
  %1220 = vmatpush1.msra.mxu0 %v1114
  %1221 = vmatprep.subr.mxu0 0.0
  %1222 = vmatpush1.msra.mxu0 %v1113
  %1223 = vmatprep.subr.mxu0 0.0
  %1224 = vmatpush1.msra.mxu0 %v1112
  %1225 = vmatprep.subr.mxu0 0.0
  %1226 = vmatpush1.msra.mxu0 %v1111
  %1227 = vmatprep.subr.mxu0 0.0
  %1228 = vmatpush1.msra.mxu0 %v1110
  %1229 = vmatprep.subr.mxu0 0.0
  %1230 = vmatpush1.msra.mxu0 %v1109
  %1231 = vmatprep.subr.mxu0 0.0
  %1232 = vmatpush1.msra.mxu0 %v1108
  %1233 = vmatprep.subr.mxu0 0.0
  %1234 = vmatpush1.msra.mxu0 %v1107
  %1235 = vmatprep.subr.mxu0 0.0
  %1236 = vmatpush1.msra.mxu0 %v1106
  %1237 = vmatprep.subr.mxu0 0.0
  %1238 = vmatpush2.msra.mxu0 0.0
  %1239 = vmatprep.subr.mxu0 0.0
  %1240 = vmatpush2.msra.mxu0 0.0
  %1241 = vmatprep.subr.mxu0 0.0
  %1242 = vmatpush2.msra.mxu0 0.0
  %1243 = vmatprep.subr.mxu0 0.0
  %1244 = vmatpush2.msra.mxu0 0.0
  %1245 = vmatprep.subr.mxu0 0.0
  %1246 = vmatpush2.msra.mxu0 0.0
  %1247 = vmatprep.subr.mxu0 0.0
  %1248 = vmatpush2.msra.mxu0 0.0
  %1249 = vmatprep.subr.mxu0 0.0
  %1250 = vmatpush2.msra.mxu0 0.0
  %1251 = vmatprep.subr.mxu0 0.0
  %1252 = vmatpush2.msra.mxu0 0.0
  %1253 = vmatprep.subr.mxu0 0.0
  %1254 = vmatpush2.msra.mxu0 0.0
  %1255 = vmatprep.subr.mxu0 0.0
  %1256 = vmatpush2.msra.mxu0 0.0
  %1257 = vmatprep.subr.mxu0 0.0
  %1258 = vmatpush2.msra.mxu0 0.0
  %1259 = vmatprep.subr.mxu0 0.0
  %1260 = vmatpush2.msra.mxu0 0.0
  %1261 = vmatprep.subr.mxu0 0.0
  %1262 = vmatpush2.msra.mxu0 0.0
  %1263 = vmatprep.subr.mxu0 0.0
  %1264 = vmatpush2.msra.mxu0 0.0
  %1265 = vmatprep.subr.mxu0 0.0
  %1266 = vmatpush2.msra.mxu0 0.0
  %1267 = vmatprep.subr.mxu0 0.0
  %1268 = vmatpush2.msra.mxu0 0.0
  %1269 = vmatprep.mubr.f32.mxu0 0.0
  %1270 = vmatmul.mubr.f32.gmra.mxu0 %v1200
  %v1271 = vpop.f32.mrf.mxu0
  %v1272 = vadd.f32 %v1204, %v1271
  %v1273 = vpop.f32.mrf.mxu0
  %1274 = vdwg.mxu0
  %vm1275 = vcmask 130048
  %1276 = vst.msk [vmem:[%s3] sm:$0xff] %vm1275, %v1272
  // Predicated region
  $region14: #{forward.1} parent=0 // pred_check
    _
  $region15: #{forward.1} parent=0 // pred_check_branch
    %1278 = sbr.rel (0) target = $region17
  $region16: #{forward.1} parent=0 // pred_region
    _
  $region17: #{forward.1} parent=0 // pred_fallthru
    _
  // Predicated region
  $region18: #{forward.1} parent=0 // pred_check
    _
  $region19: #{forward.1} parent=0 // pred_check_branch
    %1280 = sbr.rel (0) target = $region21
  $region20: #{forward.1} parent=0 // pred_region
    _
  $region21: #{forward.1} parent=0 // pred_fallthru
    _

</llo_original>
